<compile_context>
chip_gen: v6e
topology: v6e:2x2x1
jax: 0.10.0
libtpu: 0.0.40
codegen_flags: <defaults>
</compile_context>

<pallas_src>
import jax
import jax.numpy as jnp
from jax.experimental import pallas as pl
from jax.experimental.pallas import tpu as pltpu

DIM = 512                # matches the PyTorch module
INPUT_DIM = DIM * 2      # 1024
HIDDEN = INPUT_DIM // 2  # 512


def _reranker_kernel(d_ref, w1d_ref, qb_ref, w2_ref, b2_ref, o_ref):
    # d_ref:   (ROW_TILE, DIM)   f32/bf16  document-embedding tile
    # w1d_ref: (DIM, HIDDEN)     bf16      bottom half of W1 (document features)
    # qb_ref:  (1, HIDDEN)       f32       q_emb @ W1_q + b1 (precomputed per call)
    # w2_ref:  (1, HIDDEN)       bf16      W2 row
    # b2_ref:  (1, 1)            f32       SMEM scalar
    # o_ref:   (1, ROW_TILE)     f32       lane-dense scores for this tile
    d_bf16 = d_ref[...].astype(jnp.bfloat16)      # no-op if d_emb is already bf16

    # (ROW_TILE, HIDDEN) = d_tile @ W1_d with f32 accumulation on the MXU.
    h = jnp.dot(d_bf16, w1d_ref[...], preferred_element_type=jnp.float32)
    h = h + qb_ref[...]                           # row-invariant query half + b1
    # tanh-approx GELU: tanh runs on the EUP slot; cheap polynomial on the VALU.
    h = jax.nn.gelu(h, approximate=True)

    # Second linear as w2 @ h^T (A @ B^T, same pattern as q @ k^T in flash attn):
    # rows land on the lane axis so the (1, ROW_TILE) store is lane-dense/unmasked.
    scores = jax.lax.dot_general(
        w2_ref[...], h.astype(jnp.bfloat16),
        dimension_numbers=(((1,), (1,)), ((), ())),
        preferred_element_type=jnp.float32)       # (1, ROW_TILE)

    o_ref[...] = (scores + b2_ref[0, 0]).astype(o_ref.dtype)


def _pick_row_tile(n):
    # Lane-dense output needs ROW_TILE to be a multiple of 128.  Prefer the
    # largest tile that still yields >= 4 grid steps (>= 2 per v7x TensorCore);
    # fall back to 128 for small N so per-core pipelining is not fully exposed.
    for t in (512, 256, 128):
        if pl.cdiv(n, t) >= 4:
            return t
    return 128


def prepare_params(w1, b1, w2, b2):
    """One-time (per weight set) preparation.  Do NOT call per query."""
    w1 = jnp.asarray(w1, jnp.float32)
    return dict(
        w1_q=w1[:DIM],                                        # (DIM, HIDDEN) f32
        w1_d=w1[DIM:].astype(jnp.bfloat16),                   # (DIM, HIDDEN) bf16
        b1=jnp.asarray(b1, jnp.float32).reshape(1, HIDDEN),   # (1, HIDDEN)  f32
        w2_row=jnp.asarray(w2, jnp.float32).reshape(1, HIDDEN).astype(jnp.bfloat16),
        b2=jnp.asarray(b2, jnp.float32).reshape(1, 1),        # (1, 1) f32 (SMEM)
    )


@jax.jit
def reranker_forward(q_emb, d_emb, params):
    """q_emb: (1, DIM) f32, d_emb: (N, DIM) f32 or bf16 -> scores (N,) f32."""
    n = d_emb.shape[0]
    row_tile = _pick_row_tile(n)          # static under jit (n is a Python int)
    grid = (pl.cdiv(n, row_tile),)
    n_out = grid[0] * row_tile            # output over-allocated; sliced below

    # Query-dependent part of Linear-1 (tiny GEMV, done once per call by XLA).
    q_bias = q_emb.astype(jnp.float32) @ params["w1_q"] + params["b1"]  # (1, HIDDEN)

    d_bytes = d_emb.shape[0] * d_emb.shape[1] * d_emb.dtype.itemsize
    cost = pl.CostEstimate(
        flops=2 * n_out * DIM * HIDDEN + 2 * n_out * HIDDEN,
        transcendentals=n_out * HIDDEN,
        bytes_accessed=d_bytes + DIM * HIDDEN * 2 + 2 * HIDDEN * 2 + n_out * 4,
    )

    out = pl.pallas_call(
        _reranker_kernel,
        out_shape=jax.ShapeDtypeStruct((1, n_out), jnp.float32),
        grid_spec=pltpu.PrefetchScalarGridSpec(
            num_scalar_prefetch=0,
            grid=grid,
            in_specs=[
                pl.BlockSpec((row_tile, DIM), lambda i: (i, 0)),    # d_emb tile
                pl.BlockSpec((DIM, HIDDEN), lambda i: (0, 0)),      # W1_d (resident)
                pl.BlockSpec((1, HIDDEN), lambda i: (0, 0)),        # q_bias
                pl.BlockSpec((1, HIDDEN), lambda i: (0, 0)),        # W2 row
                pl.BlockSpec(memory_space=pltpu.MemorySpace.SMEM),  # b2 scalar
            ],
            out_specs=pl.BlockSpec((1, row_tile), lambda i: (0, i)),  # lane-dense
        ),
        compiler_params=pltpu.CompilerParams(
            dimension_semantics=("parallel",)),
        cost_estimate=cost,
    )(d_emb, params["w1_d"], q_bias, params["w2_row"], params["b2"])

    return out[0, :n]   # squeeze(-1) + drop lanes past N (ragged last block)


def init_params(key):
    """Deterministic synthetic params, shapes matching the nn.Linear layers.

    PyTorch stores Linear weight as (out, in); we keep the transposed (in, out)
    layout so the math is x @ W + b.
    """
    k1, k2, k3, k4 = jax.random.split(key, 4)
    s1 = 1.0 / jnp.sqrt(jnp.float32(INPUT_DIM))
    s2 = 1.0 / jnp.sqrt(jnp.float32(HIDDEN))
    w1 = jax.random.uniform(k1, (INPUT_DIM, HIDDEN), jnp.float32, -s1, s1)
    b1 = jax.random.uniform(k2, (HIDDEN,), jnp.float32, -s1, s1)
    w2 = jax.random.uniform(k3, (HIDDEN, 1), jnp.float32, -s2, s2)
    b2 = jax.random.uniform(k4, (1,), jnp.float32, -s2, s2)
    return w1, b1, w2, b2


if __name__ == "__main__":
    key = jax.random.PRNGKey(0)
    kq, kd, kp = jax.random.split(key, 3)

    N_DOCS = 300   # not a multiple of the row tile -> exercises the ragged last block
    q_emb = jax.random.normal(kq, (1, DIM), jnp.float32)
    d_emb = jax.random.normal(kd, (N_DOCS, DIM), jnp.float32)
    w1, b1, w2, b2 = init_params(kp)

    params = prepare_params(w1, b1, w2, b2)      # one-time weight prep (hoisted)
    scores = reranker_forward(q_emb, d_emb, params)
    scores = jax.block_until_ready(scores)

    # Pure-f32 reference with exact-erf GELU (the PyTorch module's semantics).
    x_ref = jnp.concatenate([jnp.broadcast_to(q_emb, (N_DOCS, DIM)), d_emb], axis=1)
    h_ref = jax.nn.gelu(x_ref @ w1 + b1, approximate=False)
    y_ref = (h_ref @ w2 + b2)[:, 0]

    assert scores.shape == (N_DOCS,)
    # bf16 MXU operands + tanh-approx GELU vs the exact-erf f32 reference.
    max_err = float(jnp.max(jnp.abs(scores - y_ref)))
    assert jnp.allclose(scores, y_ref, atol=5e-2, rtol=5e-2), max_err

    print("KERNEL_OK")
</pallas_src>

<mosaic_0001>
module attributes {stable_mosaic.version = 11 : i64} {
  func.func @_reranker_kernel(%arg0: i32, %arg1: memref<128x512xf32, #tpu.memory_space<vmem>>, %arg2: memref<512x512xbf16, #tpu.memory_space<vmem>>, %arg3: memref<1x512xf32, #tpu.memory_space<vmem>>, %arg4: memref<1x512xbf16, #tpu.memory_space<vmem>>, %arg5: memref<1x1xf32, #tpu.memory_space<smem>>, %arg6: memref<1x128xf32, #tpu.memory_space<vmem>>) attributes {dimension_semantics = [#tpu.dimension_semantics<parallel>], iteration_bounds = array<i64: 3>, scalar_prefetch = 0 : i64, scratch_operands = 0 : i64, tpu.core_type = #tpu.core_type<tc>, window_params = [{transform_indices = @transform_0, window_bounds = array<i64: 128, 512>}, {pipeline_mode = #tpu.pipeline_mode<synchronous>, transform_indices = @transform_1, window_bounds = array<i64: 512, 512>}, {pipeline_mode = #tpu.pipeline_mode<synchronous>, transform_indices = @transform_2, window_bounds = array<i64: 1, 512>}, {pipeline_mode = #tpu.pipeline_mode<synchronous>, transform_indices = @transform_3, window_bounds = array<i64: 1, 512>}, {transform_indices = @transform_4, window_bounds = array<i64: 1, 1>}, {transform_indices = @transform_5, window_bounds = array<i64: 1, 128>}]} {
    %c0 = arith.constant 0 : index
    %c0_0 = arith.constant 0 : index
    %0 = vector.load %arg1[%c0, %c0_0] : memref<128x512xf32, #tpu.memory_space<vmem>>, vector<128x512xf32>
    %1 = arith.truncf %0 : vector<128x512xf32> to vector<128x512xbf16>
    %c0_1 = arith.constant 0 : index
    %c0_2 = arith.constant 0 : index
    %2 = vector.load %arg2[%c0_1, %c0_2] : memref<512x512xbf16, #tpu.memory_space<vmem>>, vector<512x512xbf16>
    %cst = arith.constant dense<0.000000e+00> : vector<128x512xf32>
    %3 = tpu.matmul %1, %2, %cst {dimension_numbers = #tpu.dot_dimension_numbers<[1], [0], [0], [1], [0, 0, 1, 1], [], []>} : vector<128x512xbf16>, vector<512x512xbf16>, vector<128x512xf32> -> vector<128x512xf32>
    %c0_3 = arith.constant 0 : index
    %c0_4 = arith.constant 0 : index
    %4 = vector.load %arg3[%c0_3, %c0_4] : memref<1x512xf32, #tpu.memory_space<vmem>>, vector<1x512xf32>
    %5 = vector.broadcast %4 : vector<1x512xf32> to vector<128x512xf32>
    %6 = arith.addf %3, %5 : vector<128x512xf32>
    %7 = arith.mulf %6, %6 : vector<128x512xf32>
    %8 = arith.mulf %6, %7 : vector<128x512xf32>
    %cst_5 = arith.constant 4.471500e-02 : f32
    %9 = vector.broadcast %cst_5 : f32 to vector<128x512xf32>
    %10 = arith.mulf %9, %8 : vector<128x512xf32>
    %11 = arith.addf %6, %10 : vector<128x512xf32>
    %cst_6 = arith.constant 0.797884583 : f32
    %12 = vector.broadcast %cst_6 : f32 to vector<128x512xf32>
    %13 = arith.mulf %12, %11 : vector<128x512xf32>
    %14 = math.tanh %13 : vector<128x512xf32>
    %cst_7 = arith.constant 1.000000e+00 : f32
    %15 = vector.broadcast %cst_7 : f32 to vector<128x512xf32>
    %16 = arith.addf %15, %14 : vector<128x512xf32>
    %cst_8 = arith.constant 5.000000e-01 : f32
    %17 = vector.broadcast %cst_8 : f32 to vector<128x512xf32>
    %18 = arith.mulf %17, %16 : vector<128x512xf32>
    %19 = arith.mulf %6, %18 : vector<128x512xf32>
    %c0_9 = arith.constant 0 : index
    %c0_10 = arith.constant 0 : index
    %20 = vector.load %arg4[%c0_9, %c0_10] : memref<1x512xbf16, #tpu.memory_space<vmem>>, vector<1x512xbf16>
    %21 = arith.truncf %19 : vector<128x512xf32> to vector<128x512xbf16>
    %cst_11 = arith.constant dense<0.000000e+00> : vector<1x128xf32>
    %22 = tpu.matmul %20, %21, %cst_11 {dimension_numbers = #tpu.dot_dimension_numbers<[1], [1], [0], [0], [0, 0, 1, 0], [], []>} : vector<1x512xbf16>, vector<128x512xbf16>, vector<1x128xf32> -> vector<1x128xf32>
    %c0_12 = arith.constant 0 : index
    %c0_13 = arith.constant 0 : index
    %23 = memref.load %arg5[%c0_12, %c0_13] : memref<1x1xf32, #tpu.memory_space<smem>>
    %24 = vector.broadcast %23 : f32 to vector<1x128xf32>
    %25 = arith.addf %22, %24 : vector<1x128xf32>
    %c0_14 = arith.constant 0 : index
    %c0_15 = arith.constant 0 : index
    %26 = vector.load %arg6[%c0_14, %c0_15] : memref<1x128xf32, #tpu.memory_space<vmem>>, vector<1x128xf32>
    tpu.vector_store %arg6[%c0_14, %c0_15], %25 {strides = array<i32>} : memref<1x128xf32, #tpu.memory_space<vmem>>, vector<1x128xf32>,
    return
  }
  func.func @transform_0(%arg0: i32) -> (i32, i32) {
    %c0_i32 = arith.constant 0 : i32
    %c0_i32_0 = arith.constant 0 : i32
    return %arg0, %c0_i32 : i32, i32
  }
  func.func @transform_1(%arg0: i32) -> (i32, i32) {
    %c0_i32 = arith.constant 0 : i32
    %c0_i32_0 = arith.constant 0 : i32
    %c0_i32_1 = arith.constant 0 : i32
    return %c0_i32, %c0_i32_0 : i32, i32
  }
  func.func @transform_2(%arg0: i32) -> (i32, i32) {
    %c0_i32 = arith.constant 0 : i32
    %c0_i32_0 = arith.constant 0 : i32
    %c0_i32_1 = arith.constant 0 : i32
    return %c0_i32, %c0_i32_0 : i32, i32
  }
  func.func @transform_3(%arg0: i32) -> (i32, i32) {
    %c0_i32 = arith.constant 0 : i32
    %c0_i32_0 = arith.constant 0 : i32
    %c0_i32_1 = arith.constant 0 : i32
    return %c0_i32, %c0_i32_0 : i32, i32
  }
  func.func @transform_4(%arg0: i32) -> (i32, i32) {
    %c0_i32 = arith.constant 0 : i32
    %c0_i32_0 = arith.constant 0 : i32
    %c0_i32_1 = arith.constant 0 : i32
    return %c0_i32, %c0_i32_0 : i32, i32
  }
  func.func @transform_5(%arg0: i32) -> (i32, i32) {
    %c0_i32 = arith.constant 0 : i32
    %c0_i32_0 = arith.constant 0 : i32
    return %c0_i32, %arg0 : i32, i32
  }
}

</mosaic_0001>

<llo_original>
// kernel: reranker_forward.1
$region0: #{reranker_forward.1}
  #allocation0 [shape = 'u32[]', space=smem, size = 0x4, offset = 0x4, fixed_abs, tag = 'smem constant byte address 0x4 - core index']
  #allocation1 [shape = 'u32[144,128]{1,0:T(1,128)}', space=vmem, size = 0x12000, scoped, tag = 'internal scratch']
  #allocation2 [shape = 'f32[1,1]{1,0:T(1,128)S(6)}', space=smem, size = 0x200, scoped, tag = 'scoped memory for reranker_forward.1']
  %s0 = inlined_call_operand.vmem [shape: f32[300,512], index: 0, kind: input, shape index: {}]
  %s1 = inlined_call_operand.hbm [shape: bf16[512,512], index: 1, kind: input, shape index: {}]
  %s2 = inlined_call_operand.vmem [shape: f32[1,512], index: 2, kind: input, shape index: {}]
  %s3 = inlined_call_operand.vmem [shape: bf16[1,512], index: 3, kind: input, shape index: {}]
  %s4 = inlined_call_operand.<no memory space> [shape: f32[1,1], index: 4, kind: input, shape index: {}]
  %s5 = inlined_call_operand.vmem [shape: f32[1,384], index: 5, kind: output, shape index: {}]
  %s6 = sld [smem:[#allocation0]]
  $region57: #{reranker_forward.1} parent=0
    _
  %s8 = ssub.s32 1, %s6
  %s9 = scalar_select 0, %s8, %s6
  %10 = sst [smem:[#allocation2]] %s4
  $region1: #{reranker_forward.1} parent=0
    #allocation3 [shape = 'u8[524288]{0}', space=vmem, size = 0x80000, scoped, tag = 'input window, operand 1, single buffered']
    #allocation4 [shape = 's32[2]{0}', space=sflag, size = 0x8, scoped, tag = 'scoped memory for reranker_forward.1']
    %11 = vsyncpa [#allocation4], 0
    loop: start=0, step=1, limit=5
    $region2: #{reranker_forward.1} parent=1 // loop_pre_header
      _
    $region3: #{reranker_forward.1} parent=1 // loop_header
      %s13 = sphi 0, %s17
      %p14 = scmp.ge.s32.totalorder %s13, 5
      %s23 = sphi 0, %s25
      %s26 = sphi 0, %s23
      %s27 = sphi 0, %s26
      %s43 = sphi 0, %s27
      %s47 = sphi 0, %s47
      %s49 = sphi 0, %s47
      %s50 = sphi 0, %s49
      %s64 = sphi 0, %s50
      %s68 = sphi 0, %s68
      %s70 = sphi 0, %s68
      %s71 = sphi 0, %s70
      %s85 = sphi 0, %s71
      %s89 = sphi 0, %s89
      %s91 = sphi 0, %s89
      %s92 = sphi 0, %s91
      %s106 = sphi 0, %s92
      %s110 = sphi 0, %s110
      %s112 = sphi 0, %s110
      %s113 = sphi 0, %s112
      %s127 = sphi 0, %s113
      %s133 = sphi 0, %s135
      %s136 = sphi 0, %s133
      %s137 = sphi 0, %s136
      %s153 = sphi 0, %s137
    $region4: #{reranker_forward.1} parent=1 // loop_header_branch
      %16 = sbr.rel (%p14) target = $region8
    $region5: #{reranker_forward.1} parent=1 // loop_body
      %s18 = ssub.s32 %s13, 1
      %s19 = ssub.s32 %s13, 2
      %s20 = sadd.s32 %s13, 1
      %s21 = ssub.s32 %s13, %s20
      %p22 = scmp.eq.s32.totalorder %s21, 0
      %s24 = sadd.s32 %s23, 1
      %s25 = scalar_select %p22, %s23, %s24
      %p28 = pneg %p22
      %p29 = scmp.eq.s32.totalorder %s13, 2
      %p30 = por %p28, %p29
      %p31 = scmp.ne.s32.totalorder %s23, %s26
      %p32 = scmp.eq.s32.totalorder %s13, 0
      %p33 = por %p31, %p32
      %p34 = scmp.ne.s32.totalorder %s23, %s26
      %p35 = scmp.eq.s32.totalorder %s18, 2
      %p36 = por %p34, %p35
      %p37 = scmp.ne.s32.totalorder %s26, %s27
      %p38 = scmp.eq.s32.totalorder %s18, 0
      %p39 = por %p37, %p38
      %p40 = scmp.ne.s32.totalorder %s26, %s27
      %p41 = scmp.eq.s32.totalorder %s19, 2
      %p42 = por %p40, %p41
      %p44 = scmp.ne.s32.totalorder %s27, %s43
      %p45 = scmp.eq.s32.totalorder %s19, 0
      %p46 = por %p44, %p45
      %s48 = sadd.s32 %s47, 1
      %p51 = scmp.eq.s32.totalorder %s13, 2
      %p52 = scmp.ne.s32.totalorder %s47, %s49
      %p53 = scmp.eq.s32.totalorder %s13, 0
      %p54 = por %p52, %p53
      %p55 = scmp.ne.s32.totalorder %s47, %s49
      %p56 = scmp.eq.s32.totalorder %s18, 2
      %p57 = por %p55, %p56
      %p58 = scmp.ne.s32.totalorder %s49, %s50
      %p59 = scmp.eq.s32.totalorder %s18, 0
      %p60 = por %p58, %p59
      %p61 = scmp.ne.s32.totalorder %s49, %s50
      %p62 = scmp.eq.s32.totalorder %s19, 2
      %p63 = por %p61, %p62
      %p65 = scmp.ne.s32.totalorder %s50, %s64
      %p66 = scmp.eq.s32.totalorder %s19, 0
      %p67 = por %p65, %p66
      %s69 = sadd.s32 %s68, 1
      %p72 = scmp.eq.s32.totalorder %s13, 2
      %p73 = scmp.ne.s32.totalorder %s68, %s70
      %p74 = scmp.eq.s32.totalorder %s13, 0
      %p75 = por %p73, %p74
      %p76 = scmp.ne.s32.totalorder %s68, %s70
      %p77 = scmp.eq.s32.totalorder %s18, 2
      %p78 = por %p76, %p77
      %p79 = scmp.ne.s32.totalorder %s70, %s71
      %p80 = scmp.eq.s32.totalorder %s18, 0
      %p81 = por %p79, %p80
      %p82 = scmp.ne.s32.totalorder %s70, %s71
      %p83 = scmp.eq.s32.totalorder %s19, 2
      %p84 = por %p82, %p83
      %p86 = scmp.ne.s32.totalorder %s71, %s85
      %p87 = scmp.eq.s32.totalorder %s19, 0
      %p88 = por %p86, %p87
      %s90 = sadd.s32 %s89, 1
      %p93 = scmp.eq.s32.totalorder %s13, 2
      %p94 = scmp.ne.s32.totalorder %s89, %s91
      %p95 = scmp.eq.s32.totalorder %s13, 0
      %p96 = por %p94, %p95
      %p97 = scmp.ne.s32.totalorder %s89, %s91
      %p98 = scmp.eq.s32.totalorder %s18, 2
      %p99 = por %p97, %p98
      %p100 = scmp.ne.s32.totalorder %s91, %s92
      %p101 = scmp.eq.s32.totalorder %s18, 0
      %p102 = por %p100, %p101
      %p103 = scmp.ne.s32.totalorder %s91, %s92
      %p104 = scmp.eq.s32.totalorder %s19, 2
      %p105 = por %p103, %p104
      %p107 = scmp.ne.s32.totalorder %s92, %s106
      %p108 = scmp.eq.s32.totalorder %s19, 0
      %p109 = por %p107, %p108
      %s111 = sadd.s32 %s110, 1
      %p114 = scmp.eq.s32.totalorder %s13, 2
      %p115 = scmp.ne.s32.totalorder %s110, %s112
      %p116 = scmp.eq.s32.totalorder %s13, 0
      %p117 = por %p115, %p116
      %p118 = scmp.ne.s32.totalorder %s110, %s112
      %p119 = scmp.eq.s32.totalorder %s18, 2
      %p120 = por %p118, %p119
      %p121 = scmp.ne.s32.totalorder %s112, %s113
      %p122 = scmp.eq.s32.totalorder %s18, 0
      %p123 = por %p121, %p122
      %p124 = scmp.ne.s32.totalorder %s112, %s113
      %p125 = scmp.eq.s32.totalorder %s19, 2
      %p126 = por %p124, %p125
      %p128 = scmp.ne.s32.totalorder %s113, %s127
      %p129 = scmp.eq.s32.totalorder %s19, 0
      %p130 = por %p128, %p129
      %s131 = ssub.s32 %s13, %s20
      %p132 = scmp.eq.s32.totalorder %s131, 0
      %s134 = sadd.s32 %s133, 1
      %s135 = scalar_select %p132, %s133, %s134
      %p138 = pneg %p132
      %p139 = scmp.eq.s32.totalorder %s13, 2
      %p140 = por %p138, %p139
      %p141 = scmp.ne.s32.totalorder %s133, %s136
      %p142 = scmp.eq.s32.totalorder %s13, 0
      %p143 = por %p141, %p142
      %p144 = scmp.ne.s32.totalorder %s133, %s136
      %p145 = scmp.eq.s32.totalorder %s18, 2
      %p146 = por %p144, %p145
      %p147 = scmp.ne.s32.totalorder %s136, %s137
      %p148 = scmp.eq.s32.totalorder %s18, 0
      %p149 = por %p147, %p148
      %p150 = scmp.ne.s32.totalorder %s136, %s137
      %p151 = scmp.eq.s32.totalorder %s19, 2
      %p152 = por %p150, %p151
      %p154 = scmp.ne.s32.totalorder %s137, %s153
      %p155 = scmp.eq.s32.totalorder %s19, 0
      %p156 = por %p154, %p155
      %p157 = scmp.le.s32.totalorder 1, %s13
      %p158 = scmp.lt.s32.totalorder %s13, 4
      %p159 = pnand %p157, %p158
      %p160 = pneg %p159
      // Predicated region
      $region9: #{reranker_forward.1} parent=5 // pred_check
        _
      $region10: #{reranker_forward.1} parent=5 // pred_check_branch
        %162 = sbr.rel (%p159) target = $region12
      $region11: #{reranker_forward.1} parent=5 // pred_region
        %s163 = ssub.s32 %s13, 1
        // Predicated region
        $region13: #{reranker_forward.1} parent=11 // pred_check
          %p164 = pneg %p60
        $region14: #{reranker_forward.1} parent=11 // pred_check_branch
          %166 = sbr.rel (%p164) target = $region16
        $region15: #{reranker_forward.1} parent=11 // pred_region
          %s168 = ssub.s32 16384, 16384
          %169 = vsyncadd [#allocation4], %s168
          %s170 = sshll.u32 [#allocation3], 4
          %s171 = int_to_ptr.vmem [resolvable:$true] %s170
          %176 = dma.hbm_to_vmem [thread:$0]  %s1, 16384, %s171, [#allocation4], 256, 256, 16
        $region16: #{reranker_forward.1} parent=11 // pred_fallthru
          _
        // Predicated region
        $region17: #{reranker_forward.1} parent=11 // pred_check
          %p177 = pneg %p81
        $region18: #{reranker_forward.1} parent=11 // pred_check_branch
          %179 = sbr.rel (%p177) target = $region20
        $region19: #{reranker_forward.1} parent=11 // pred_region
          _
        $region20: #{reranker_forward.1} parent=11 // pred_fallthru
          _
        // Predicated region
        $region21: #{reranker_forward.1} parent=11 // pred_check
          %p180 = pneg %p102
        $region22: #{reranker_forward.1} parent=11 // pred_check_branch
          %182 = sbr.rel (%p180) target = $region24
        $region23: #{reranker_forward.1} parent=11 // pred_region
          _
        $region24: #{reranker_forward.1} parent=11 // pred_fallthru
          _
        // Predicated region
        $region25: #{reranker_forward.1} parent=11 // pred_check
          %p183 = pneg %p123
        $region26: #{reranker_forward.1} parent=11 // pred_check_branch
          %185 = sbr.rel (%p183) target = $region28
        $region27: #{reranker_forward.1} parent=11 // pred_region
          _
        $region28: #{reranker_forward.1} parent=11 // pred_fallthru
          _
      $region12: #{reranker_forward.1} parent=5 // pred_fallthru
        _
      %p186 = scmp.lt.s32.totalorder %s13, 3
      // Predicated region
      $region29: #{reranker_forward.1} parent=5 // pred_check
        %p187 = pneg %p186
      $region30: #{reranker_forward.1} parent=5 // pred_check_branch
        %189 = sbr.rel (%p187) target = $region32
      $region31: #{reranker_forward.1} parent=5 // pred_region
        // Predicated region
        $region33: #{reranker_forward.1} parent=31 // pred_check
          %p190 = pneg %p33
        $region34: #{reranker_forward.1} parent=31 // pred_check_branch
          %192 = sbr.rel (%p190) target = $region36
        $region35: #{reranker_forward.1} parent=31 // pred_region
          %s193 = smul.u32 16, %s13
          %s194 = ssub.s32 38, %s193
          %p195 = scmp.lt.s32.totalorder %s194, 16
          %s196 = scalar_select %p195, %s194, 16
          %s197 = smul.u32 128, %s196
          %s198 = smul.u32 %s197, 4
          %p199 = scmp.lt.s32.totalorder %s193, 37
          %s200 = scalar_select %p199, %s193, 37
          %s201 = smul.addr %s200, 4
          %s202 = smul.addr %s201, 8
          %s203 = scalar_lea.vmem %s0, %s202
          %s204 = smul.u32 16, %s13
          %s205 = ssub.s32 38, %s204
          %p206 = scmp.lt.s32.totalorder %s205, 16
          %s207 = scalar_select %p206, %s205, 16
          %s208 = smul.u32 128, %s207
          %s209 = smul.u32 %s208, 4
        $region36: #{reranker_forward.1} parent=31 // pred_fallthru
          _
      $region32: #{reranker_forward.1} parent=5 // pred_fallthru
        _
      %p210 = scmp.le.s32.totalorder 1, %s13
      %p211 = scmp.lt.s32.totalorder %s13, 4
      %p212 = pnand %p210, %p211
      %p213 = pneg %p212
      // Predicated region
      $region37: #{reranker_forward.1} parent=5 // pred_check
        _
      $region38: #{reranker_forward.1} parent=5 // pred_check_branch
        %215 = sbr.rel (%p212) target = $region40
      $region39: #{reranker_forward.1} parent=5 // pred_region
        %s216 = ssub.s32 %s13, 1
        // Predicated region
        $region41: #{reranker_forward.1} parent=39 // pred_check
          %p217 = pneg %p60
        $region42: #{reranker_forward.1} parent=39 // pred_check_branch
          %219 = sbr.rel (%p217) target = $region44
        $region43: #{reranker_forward.1} parent=39 // pred_region
          %220 = dma.done [#allocation4], 16384
        $region44: #{reranker_forward.1} parent=39 // pred_fallthru
          _
        %s221 = smul.u32 16, %s18
        %s222 = ssub.s32 38, %s221
        %p223 = scmp.lt.s32.totalorder %s222, 16
        %s224 = scalar_select %p223, %s222, 16
        %s225 = smul.u32 128, %s224
        %s226 = smul.u32 %s225, 4
        %p227 = scmp.lt.s32.totalorder %s221, 37
        %s228 = scalar_select %p227, %s221, 37
        %s229 = smul.addr %s228, 4
        %s230 = smul.addr %s229, 8
        %s231 = scalar_lea.vmem %s0, %s230
        %p232 = pneg %p39
        %p233 = pneg %p36
        %p234 = pneg %p60
        %p235 = pneg %p57
        %p236 = pneg %p81
        %p237 = pneg %p78
        %p238 = pneg %p102
        %p239 = pneg %p99
        %p240 = pneg %p123
        %p241 = pneg %p120
        %p242 = pneg %p149
        %p243 = pneg %p146
        %p244 = scmp.lt.s32.totalorder %s18, 2
        %s245 = scalar_select %p244, %s18, 2
        %s246 = scalar_lea.vmem %s5, %s245
        %s247 = smul.u32 16, %s18
        %s248 = ssub.s32 38, %s247
        %p249 = scmp.lt.s32.totalorder %s248, 16
        %s250 = scalar_select %p249, %s248, 16
        %s251 = smul.u32 128, %s250
        %s252 = smul.u32 %s251, 4
        %p253 = scmp.lt.s32.totalorder %s247, 37
        %s254 = scalar_select %p253, %s247, 37
        %s255 = smul.addr %s254, 4
        %s256 = smul.addr %s255, 8
        %s257 = scalar_lea.vmem %s0, %s256
        %s258 = smul.u32 16, %s18
        %s259 = ssub.s32 38, %s258
        %p260 = scmp.lt.s32.totalorder %s259, 16
        %s261 = scalar_select %p260, %s259, 16
        %s262 = smul.u32 128, %s261
        %s263 = smul.u32 %s262, 4
        %p264 = scmp.lt.s32.totalorder %s18, 2
        %s265 = scalar_select %p264, %s18, 2
        %s266 = scalar_lea.vmem %s5, %s265
        %v268 = vld [vmem:[%s257] sm:$0xff]
        %v269 = vld [vmem:[%s257 + $0x8] sm:$0xff]
        %v270 = vld [vmem:[%s257 + $0x10] sm:$0xff]
        %v271 = vld [vmem:[%s257 + $0x18] sm:$0xff]
        %v272 = vld [vmem:[%s257 + $0x20] sm:$0xff]
        %v273 = vld [vmem:[%s257 + $0x28] sm:$0xff]
        %v274 = vld [vmem:[%s257 + $0x30] sm:$0xff]
        %v275 = vld [vmem:[%s257 + $0x38] sm:$0xff]
        %v276 = vld [vmem:[%s257 + $0x40] sm:$0xff]
        %v277 = vld [vmem:[%s257 + $0x48] sm:$0xff]
        %v278 = vld [vmem:[%s257 + $0x50] sm:$0xff]
        %v279 = vld [vmem:[%s257 + $0x58] sm:$0xff]
        %v280 = vld [vmem:[%s257 + $0x60] sm:$0xff]
        %v281 = vld [vmem:[%s257 + $0x68] sm:$0xff]
        %v282 = vld [vmem:[%s257 + $0x70] sm:$0xff]
        %v283 = vld [vmem:[%s257 + $0x78] sm:$0xff]
        %v284 = vld [vmem:[%s257 + $0x80] sm:$0xff]
        %v285 = vld [vmem:[%s257 + $0x88] sm:$0xff]
        %v286 = vld [vmem:[%s257 + $0x90] sm:$0xff]
        %v287 = vld [vmem:[%s257 + $0x98] sm:$0xff]
        %v288 = vld [vmem:[%s257 + $0xa0] sm:$0xff]
        %v289 = vld [vmem:[%s257 + $0xa8] sm:$0xff]
        %v290 = vld [vmem:[%s257 + $0xb0] sm:$0xff]
        %v291 = vld [vmem:[%s257 + $0xb8] sm:$0xff]
        %v292 = vld [vmem:[%s257 + $0xc0] sm:$0xff]
        %v293 = vld [vmem:[%s257 + $0xc8] sm:$0xff]
        %v294 = vld [vmem:[%s257 + $0xd0] sm:$0xff]
        %v295 = vld [vmem:[%s257 + $0xd8] sm:$0xff]
        %v296 = vld [vmem:[%s257 + $0xe0] sm:$0xff]
        %v297 = vld [vmem:[%s257 + $0xe8] sm:$0xff]
        %v298 = vld [vmem:[%s257 + $0xf0] sm:$0xff]
        %v299 = vld [vmem:[%s257 + $0xf8] sm:$0xff]
        %v300 = vld [vmem:[%s257 + $0x100] sm:$0xff]
        %v301 = vld [vmem:[%s257 + $0x108] sm:$0xff]
        %v302 = vld [vmem:[%s257 + $0x110] sm:$0xff]
        %v303 = vld [vmem:[%s257 + $0x118] sm:$0xff]
        %v304 = vld [vmem:[%s257 + $0x120] sm:$0xff]
        %v305 = vld [vmem:[%s257 + $0x128] sm:$0xff]
        %v306 = vld [vmem:[%s257 + $0x130] sm:$0xff]
        %v307 = vld [vmem:[%s257 + $0x138] sm:$0xff]
        %v308 = vld [vmem:[%s257 + $0x140] sm:$0xff]
        %v309 = vld [vmem:[%s257 + $0x148] sm:$0xff]
        %v310 = vld [vmem:[%s257 + $0x150] sm:$0xff]
        %v311 = vld [vmem:[%s257 + $0x158] sm:$0xff]
        %v312 = vld [vmem:[%s257 + $0x160] sm:$0xff]
        %v313 = vld [vmem:[%s257 + $0x168] sm:$0xff]
        %v314 = vld [vmem:[%s257 + $0x170] sm:$0xff]
        %v315 = vld [vmem:[%s257 + $0x178] sm:$0xff]
        %v316 = vld [vmem:[%s257 + $0x180] sm:$0xff]
        %v317 = vld [vmem:[%s257 + $0x188] sm:$0xff]
        %v318 = vld [vmem:[%s257 + $0x190] sm:$0xff]
        %v319 = vld [vmem:[%s257 + $0x198] sm:$0xff]
        %v320 = vld [vmem:[%s257 + $0x1a0] sm:$0xff]
        %v321 = vld [vmem:[%s257 + $0x1a8] sm:$0xff]
        %v322 = vld [vmem:[%s257 + $0x1b0] sm:$0xff]
        %v323 = vld [vmem:[%s257 + $0x1b8] sm:$0xff]
        %v324 = vld [vmem:[%s257 + $0x1c0] sm:$0xff]
        %v325 = vld [vmem:[%s257 + $0x1c8] sm:$0xff]
        %v326 = vld [vmem:[%s257 + $0x1d0] sm:$0xff]
        %v327 = vld [vmem:[%s257 + $0x1d8] sm:$0xff]
        %v328 = vld [vmem:[%s257 + $0x1e0] sm:$0xff]
        %v329 = vld [vmem:[%s257 + $0x1e8] sm:$0xff]
        %v330 = vld [vmem:[%s257 + $0x1f0] sm:$0xff]
        %v331 = vld [vmem:[%s257 + $0x1f8] sm:$0xff]
        %v332 = vpack.c.bf16 %v272, %v268
        %v333 = vpack.c.bf16 %v273, %v269
        %v334 = vpack.c.bf16 %v274, %v270
        %v335 = vpack.c.bf16 %v275, %v271
        %v336 = vpack.c.bf16 %v280, %v276
        %v337 = vpack.c.bf16 %v281, %v277
        %v338 = vpack.c.bf16 %v282, %v278
        %v339 = vpack.c.bf16 %v283, %v279
        %v340 = vpack.c.bf16 %v288, %v284
        %v341 = vpack.c.bf16 %v289, %v285
        %v342 = vpack.c.bf16 %v290, %v286
        %v343 = vpack.c.bf16 %v291, %v287
        %v344 = vpack.c.bf16 %v296, %v292
        %v345 = vpack.c.bf16 %v297, %v293
        %v346 = vpack.c.bf16 %v298, %v294
        %v347 = vpack.c.bf16 %v299, %v295
        %v348 = vpack.c.bf16 %v304, %v300
        %v349 = vpack.c.bf16 %v305, %v301
        %v350 = vpack.c.bf16 %v306, %v302
        %v351 = vpack.c.bf16 %v307, %v303
        %v352 = vpack.c.bf16 %v312, %v308
        %v353 = vpack.c.bf16 %v313, %v309
        %v354 = vpack.c.bf16 %v314, %v310
        %v355 = vpack.c.bf16 %v315, %v311
        %v356 = vpack.c.bf16 %v320, %v316
        %v357 = vpack.c.bf16 %v321, %v317
        %v358 = vpack.c.bf16 %v322, %v318
        %v359 = vpack.c.bf16 %v323, %v319
        %v360 = vpack.c.bf16 %v328, %v324
        %v361 = vpack.c.bf16 %v329, %v325
        %v362 = vpack.c.bf16 %v330, %v326
        %v363 = vpack.c.bf16 %v331, %v327
        %v364 = vld [vmem:[#allocation3] sm:$0xff]
        %v365 = vld [vmem:[#allocation3 + $0x8] sm:$0xff]
        %v366 = vld [vmem:[#allocation3 + $0x10] sm:$0xff]
        %v367 = vld [vmem:[#allocation3 + $0x18] sm:$0xff]
        %v368 = vld [vmem:[#allocation3 + $0x20] sm:$0xff]
        %v369 = vld [vmem:[#allocation3 + $0x28] sm:$0xff]
        %v370 = vld [vmem:[#allocation3 + $0x30] sm:$0xff]
        %v371 = vld [vmem:[#allocation3 + $0x38] sm:$0xff]
        %v372 = vld [vmem:[#allocation3 + $0x40] sm:$0xff]
        %v373 = vld [vmem:[#allocation3 + $0x48] sm:$0xff]
        %v374 = vld [vmem:[#allocation3 + $0x50] sm:$0xff]
        %v375 = vld [vmem:[#allocation3 + $0x58] sm:$0xff]
        %v376 = vld [vmem:[#allocation3 + $0x60] sm:$0xff]
        %v377 = vld [vmem:[#allocation3 + $0x68] sm:$0xff]
        %v378 = vld [vmem:[#allocation3 + $0x70] sm:$0xff]
        %v379 = vld [vmem:[#allocation3 + $0x78] sm:$0xff]
        %v380 = vld [vmem:[#allocation3 + $0x80] sm:$0xff]
        %v381 = vld [vmem:[#allocation3 + $0x88] sm:$0xff]
        %v382 = vld [vmem:[#allocation3 + $0x90] sm:$0xff]
        %v383 = vld [vmem:[#allocation3 + $0x98] sm:$0xff]
        %v384 = vld [vmem:[#allocation3 + $0xa0] sm:$0xff]
        %v385 = vld [vmem:[#allocation3 + $0xa8] sm:$0xff]
        %v386 = vld [vmem:[#allocation3 + $0xb0] sm:$0xff]
        %v387 = vld [vmem:[#allocation3 + $0xb8] sm:$0xff]
        %v388 = vld [vmem:[#allocation3 + $0xc0] sm:$0xff]
        %v389 = vld [vmem:[#allocation3 + $0xc8] sm:$0xff]
        %v390 = vld [vmem:[#allocation3 + $0xd0] sm:$0xff]
        %v391 = vld [vmem:[#allocation3 + $0xd8] sm:$0xff]
        %v392 = vld [vmem:[#allocation3 + $0xe0] sm:$0xff]
        %v393 = vld [vmem:[#allocation3 + $0xe8] sm:$0xff]
        %v394 = vld [vmem:[#allocation3 + $0xf0] sm:$0xff]
        %v395 = vld [vmem:[#allocation3 + $0xf8] sm:$0xff]
        %v396 = vld [vmem:[#allocation3 + $0x100] sm:$0xff]
        %v397 = vld [vmem:[#allocation3 + $0x108] sm:$0xff]
        %v398 = vld [vmem:[#allocation3 + $0x110] sm:$0xff]
        %v399 = vld [vmem:[#allocation3 + $0x118] sm:$0xff]
        %v400 = vld [vmem:[#allocation3 + $0x120] sm:$0xff]
        %v401 = vld [vmem:[#allocation3 + $0x128] sm:$0xff]
        %v402 = vld [vmem:[#allocation3 + $0x130] sm:$0xff]
        %v403 = vld [vmem:[#allocation3 + $0x138] sm:$0xff]
        %v404 = vld [vmem:[#allocation3 + $0x140] sm:$0xff]
        %v405 = vld [vmem:[#allocation3 + $0x148] sm:$0xff]
        %v406 = vld [vmem:[#allocation3 + $0x150] sm:$0xff]
        %v407 = vld [vmem:[#allocation3 + $0x158] sm:$0xff]
        %v408 = vld [vmem:[#allocation3 + $0x160] sm:$0xff]
        %v409 = vld [vmem:[#allocation3 + $0x168] sm:$0xff]
        %v410 = vld [vmem:[#allocation3 + $0x170] sm:$0xff]
        %v411 = vld [vmem:[#allocation3 + $0x178] sm:$0xff]
        %v412 = vld [vmem:[#allocation3 + $0x180] sm:$0xff]
        %v413 = vld [vmem:[#allocation3 + $0x188] sm:$0xff]
        %v414 = vld [vmem:[#allocation3 + $0x190] sm:$0xff]
        %v415 = vld [vmem:[#allocation3 + $0x198] sm:$0xff]
        %v416 = vld [vmem:[#allocation3 + $0x1a0] sm:$0xff]
        %v417 = vld [vmem:[#allocation3 + $0x1a8] sm:$0xff]
        %v418 = vld [vmem:[#allocation3 + $0x1b0] sm:$0xff]
        %v419 = vld [vmem:[#allocation3 + $0x1b8] sm:$0xff]
        %v420 = vld [vmem:[#allocation3 + $0x1c0] sm:$0xff]
        %v421 = vld [vmem:[#allocation3 + $0x1c8] sm:$0xff]
        %v422 = vld [vmem:[#allocation3 + $0x1d0] sm:$0xff]
        %v423 = vld [vmem:[#allocation3 + $0x1d8] sm:$0xff]
        %v424 = vld [vmem:[#allocation3 + $0x1e0] sm:$0xff]
        %v425 = vld [vmem:[#allocation3 + $0x1e8] sm:$0xff]
        %v426 = vld [vmem:[#allocation3 + $0x1f0] sm:$0xff]
        %v427 = vld [vmem:[#allocation3 + $0x1f8] sm:$0xff]
        %v428 = vld [vmem:[#allocation3 + $0x200] sm:$0xff]
        %v429 = vld [vmem:[#allocation3 + $0x208] sm:$0xff]
        %v430 = vld [vmem:[#allocation3 + $0x210] sm:$0xff]
        %v431 = vld [vmem:[#allocation3 + $0x218] sm:$0xff]
        %v432 = vld [vmem:[#allocation3 + $0x220] sm:$0xff]
        %v433 = vld [vmem:[#allocation3 + $0x228] sm:$0xff]
        %v434 = vld [vmem:[#allocation3 + $0x230] sm:$0xff]
        %v435 = vld [vmem:[#allocation3 + $0x238] sm:$0xff]
        %v436 = vld [vmem:[#allocation3 + $0x240] sm:$0xff]
        %v437 = vld [vmem:[#allocation3 + $0x248] sm:$0xff]
        %v438 = vld [vmem:[#allocation3 + $0x250] sm:$0xff]
        %v439 = vld [vmem:[#allocation3 + $0x258] sm:$0xff]
        %v440 = vld [vmem:[#allocation3 + $0x260] sm:$0xff]
        %v441 = vld [vmem:[#allocation3 + $0x268] sm:$0xff]
        %v442 = vld [vmem:[#allocation3 + $0x270] sm:$0xff]
        %v443 = vld [vmem:[#allocation3 + $0x278] sm:$0xff]
        %v444 = vld [vmem:[#allocation3 + $0x280] sm:$0xff]
        %v445 = vld [vmem:[#allocation3 + $0x288] sm:$0xff]
        %v446 = vld [vmem:[#allocation3 + $0x290] sm:$0xff]
        %v447 = vld [vmem:[#allocation3 + $0x298] sm:$0xff]
        %v448 = vld [vmem:[#allocation3 + $0x2a0] sm:$0xff]
        %v449 = vld [vmem:[#allocation3 + $0x2a8] sm:$0xff]
        %v450 = vld [vmem:[#allocation3 + $0x2b0] sm:$0xff]
        %v451 = vld [vmem:[#allocation3 + $0x2b8] sm:$0xff]
        %v452 = vld [vmem:[#allocation3 + $0x2c0] sm:$0xff]
        %v453 = vld [vmem:[#allocation3 + $0x2c8] sm:$0xff]
        %v454 = vld [vmem:[#allocation3 + $0x2d0] sm:$0xff]
        %v455 = vld [vmem:[#allocation3 + $0x2d8] sm:$0xff]
        %v456 = vld [vmem:[#allocation3 + $0x2e0] sm:$0xff]
        %v457 = vld [vmem:[#allocation3 + $0x2e8] sm:$0xff]
        %v458 = vld [vmem:[#allocation3 + $0x2f0] sm:$0xff]
        %v459 = vld [vmem:[#allocation3 + $0x2f8] sm:$0xff]
        %v460 = vld [vmem:[#allocation3 + $0x300] sm:$0xff]
        %v461 = vld [vmem:[#allocation3 + $0x308] sm:$0xff]
        %v462 = vld [vmem:[#allocation3 + $0x310] sm:$0xff]
        %v463 = vld [vmem:[#allocation3 + $0x318] sm:$0xff]
        %v464 = vld [vmem:[#allocation3 + $0x320] sm:$0xff]
        %v465 = vld [vmem:[#allocation3 + $0x328] sm:$0xff]
        %v466 = vld [vmem:[#allocation3 + $0x330] sm:$0xff]
        %v467 = vld [vmem:[#allocation3 + $0x338] sm:$0xff]
        %v468 = vld [vmem:[#allocation3 + $0x340] sm:$0xff]
        %v469 = vld [vmem:[#allocation3 + $0x348] sm:$0xff]
        %v470 = vld [vmem:[#allocation3 + $0x350] sm:$0xff]
        %v471 = vld [vmem:[#allocation3 + $0x358] sm:$0xff]
        %v472 = vld [vmem:[#allocation3 + $0x360] sm:$0xff]
        %v473 = vld [vmem:[#allocation3 + $0x368] sm:$0xff]
        %v474 = vld [vmem:[#allocation3 + $0x370] sm:$0xff]
        %v475 = vld [vmem:[#allocation3 + $0x378] sm:$0xff]
        %v476 = vld [vmem:[#allocation3 + $0x380] sm:$0xff]
        %v477 = vld [vmem:[#allocation3 + $0x388] sm:$0xff]
        %v478 = vld [vmem:[#allocation3 + $0x390] sm:$0xff]
        %v479 = vld [vmem:[#allocation3 + $0x398] sm:$0xff]
        %v480 = vld [vmem:[#allocation3 + $0x3a0] sm:$0xff]
        %v481 = vld [vmem:[#allocation3 + $0x3a8] sm:$0xff]
        %v482 = vld [vmem:[#allocation3 + $0x3b0] sm:$0xff]
        %v483 = vld [vmem:[#allocation3 + $0x3b8] sm:$0xff]
        %v484 = vld [vmem:[#allocation3 + $0x3c0] sm:$0xff]
        %v485 = vld [vmem:[#allocation3 + $0x3c8] sm:$0xff]
        %v486 = vld [vmem:[#allocation3 + $0x3d0] sm:$0xff]
        %v487 = vld [vmem:[#allocation3 + $0x3d8] sm:$0xff]
        %v488 = vld [vmem:[#allocation3 + $0x3e0] sm:$0xff]
        %v489 = vld [vmem:[#allocation3 + $0x3e8] sm:$0xff]
        %v490 = vld [vmem:[#allocation3 + $0x3f0] sm:$0xff]
        %v491 = vld [vmem:[#allocation3 + $0x3f8] sm:$0xff]
        %v492 = vld [vmem:[%s2] sm:$0xf]
        %v494 = vlaneseq
        %v495 = vshrl.u32 %v494, 7
        %v496 = vsub.s32 0, %v495
        %v497 = vrot.slane %v492, %v496
        %v498 = vlaneseq
        %v499 = vshrl.u32 %v498, 7
        %v500 = vsub.s32 1, %v499
        %v501 = vrot.slane %v492, %v500
        %v502 = vlaneseq
        %v503 = vshrl.u32 %v502, 7
        %v504 = vsub.s32 2, %v503
        %v505 = vrot.slane %v492, %v504
        %v506 = vlaneseq
        %v507 = vshrl.u32 %v506, 7
        %v508 = vsub.s32 3, %v507
        %v509 = vrot.slane %v492, %v508
        %v642 = vunpack.c.l.b16 %v364
        %v643 = vunpack.c.h.b16 %v364
        %v644 = vunpack.c.l.b16 %v365
        %v645 = vunpack.c.h.b16 %v365
        %v646 = vunpack.c.l.b16 %v366
        %v647 = vunpack.c.h.b16 %v366
        %v648 = vunpack.c.l.b16 %v367
        %v649 = vunpack.c.h.b16 %v367
        %v650 = vunpack.c.l.b16 %v368
        %v651 = vunpack.c.h.b16 %v368
        %v652 = vunpack.c.l.b16 %v369
        %v653 = vunpack.c.h.b16 %v369
        %v654 = vunpack.c.l.b16 %v370
        %v655 = vunpack.c.h.b16 %v370
        %v656 = vunpack.c.l.b16 %v371
        %v657 = vunpack.c.h.b16 %v371
        %v658 = vunpack.c.l.b16 %v372
        %v659 = vunpack.c.h.b16 %v372
        %v660 = vunpack.c.l.b16 %v373
        %v661 = vunpack.c.h.b16 %v373
        %v662 = vunpack.c.l.b16 %v374
        %v663 = vunpack.c.h.b16 %v374
        %v664 = vunpack.c.l.b16 %v375
        %v665 = vunpack.c.h.b16 %v375
        %v666 = vunpack.c.l.b16 %v376
        %v667 = vunpack.c.h.b16 %v376
        %v668 = vunpack.c.l.b16 %v377
        %v669 = vunpack.c.h.b16 %v377
        %v670 = vunpack.c.l.b16 %v378
        %v671 = vunpack.c.h.b16 %v378
        %v672 = vunpack.c.l.b16 %v379
        %v673 = vunpack.c.h.b16 %v379
        %v674 = vunpack.c.l.b16 %v380
        %v675 = vunpack.c.h.b16 %v380
        %v676 = vunpack.c.l.b16 %v381
        %v677 = vunpack.c.h.b16 %v381
        %v678 = vunpack.c.l.b16 %v382
        %v679 = vunpack.c.h.b16 %v382
        %v680 = vunpack.c.l.b16 %v383
        %v681 = vunpack.c.h.b16 %v383
        %v682 = vunpack.c.l.b16 %v384
        %v683 = vunpack.c.h.b16 %v384
        %v684 = vunpack.c.l.b16 %v385
        %v685 = vunpack.c.h.b16 %v385
        %v686 = vunpack.c.l.b16 %v386
        %v687 = vunpack.c.h.b16 %v386
        %v688 = vunpack.c.l.b16 %v387
        %v689 = vunpack.c.h.b16 %v387
        %v690 = vunpack.c.l.b16 %v388
        %v691 = vunpack.c.h.b16 %v388
        %v692 = vunpack.c.l.b16 %v389
        %v693 = vunpack.c.h.b16 %v389
        %v694 = vunpack.c.l.b16 %v390
        %v695 = vunpack.c.h.b16 %v390
        %v696 = vunpack.c.l.b16 %v391
        %v697 = vunpack.c.h.b16 %v391
        %v698 = vunpack.c.l.b16 %v392
        %v699 = vunpack.c.h.b16 %v392
        %v700 = vunpack.c.l.b16 %v393
        %v701 = vunpack.c.h.b16 %v393
        %v702 = vunpack.c.l.b16 %v394
        %v703 = vunpack.c.h.b16 %v394
        %v704 = vunpack.c.l.b16 %v395
        %v705 = vunpack.c.h.b16 %v395
        %v706 = vunpack.c.l.b16 %v396
        %v707 = vunpack.c.h.b16 %v396
        %v708 = vunpack.c.l.b16 %v397
        %v709 = vunpack.c.h.b16 %v397
        %v710 = vunpack.c.l.b16 %v398
        %v711 = vunpack.c.h.b16 %v398
        %v712 = vunpack.c.l.b16 %v399
        %v713 = vunpack.c.h.b16 %v399
        %v714 = vunpack.c.l.b16 %v400
        %v715 = vunpack.c.h.b16 %v400
        %v716 = vunpack.c.l.b16 %v401
        %v717 = vunpack.c.h.b16 %v401
        %v718 = vunpack.c.l.b16 %v402
        %v719 = vunpack.c.h.b16 %v402
        %v720 = vunpack.c.l.b16 %v403
        %v721 = vunpack.c.h.b16 %v403
        %v722 = vunpack.c.l.b16 %v404
        %v723 = vunpack.c.h.b16 %v404
        %v724 = vunpack.c.l.b16 %v405
        %v725 = vunpack.c.h.b16 %v405
        %v726 = vunpack.c.l.b16 %v406
        %v727 = vunpack.c.h.b16 %v406
        %v728 = vunpack.c.l.b16 %v407
        %v729 = vunpack.c.h.b16 %v407
        %v730 = vunpack.c.l.b16 %v408
        %v731 = vunpack.c.h.b16 %v408
        %v732 = vunpack.c.l.b16 %v409
        %v733 = vunpack.c.h.b16 %v409
        %v734 = vunpack.c.l.b16 %v410
        %v735 = vunpack.c.h.b16 %v410
        %v736 = vunpack.c.l.b16 %v411
        %v737 = vunpack.c.h.b16 %v411
        %v738 = vunpack.c.l.b16 %v412
        %v739 = vunpack.c.h.b16 %v412
        %v740 = vunpack.c.l.b16 %v413
        %v741 = vunpack.c.h.b16 %v413
        %v742 = vunpack.c.l.b16 %v414
        %v743 = vunpack.c.h.b16 %v414
        %v744 = vunpack.c.l.b16 %v415
        %v745 = vunpack.c.h.b16 %v415
        %v746 = vunpack.c.l.b16 %v416
        %v747 = vunpack.c.h.b16 %v416
        %v748 = vunpack.c.l.b16 %v417
        %v749 = vunpack.c.h.b16 %v417
        %v750 = vunpack.c.l.b16 %v418
        %v751 = vunpack.c.h.b16 %v418
        %v752 = vunpack.c.l.b16 %v419
        %v753 = vunpack.c.h.b16 %v419
        %v754 = vunpack.c.l.b16 %v420
        %v755 = vunpack.c.h.b16 %v420
        %v756 = vunpack.c.l.b16 %v421
        %v757 = vunpack.c.h.b16 %v421
        %v758 = vunpack.c.l.b16 %v422
        %v759 = vunpack.c.h.b16 %v422
        %v760 = vunpack.c.l.b16 %v423
        %v761 = vunpack.c.h.b16 %v423
        %v762 = vunpack.c.l.b16 %v424
        %v763 = vunpack.c.h.b16 %v424
        %v764 = vunpack.c.l.b16 %v425
        %v765 = vunpack.c.h.b16 %v425
        %v766 = vunpack.c.l.b16 %v426
        %v767 = vunpack.c.h.b16 %v426
        %v768 = vunpack.c.l.b16 %v427
        %v769 = vunpack.c.h.b16 %v427
        %v770 = vunpack.c.l.b16 %v428
        %v771 = vunpack.c.h.b16 %v428
        %v772 = vunpack.c.l.b16 %v429
        %v773 = vunpack.c.h.b16 %v429
        %v774 = vunpack.c.l.b16 %v430
        %v775 = vunpack.c.h.b16 %v430
        %v776 = vunpack.c.l.b16 %v431
        %v777 = vunpack.c.h.b16 %v431
        %v778 = vunpack.c.l.b16 %v432
        %v779 = vunpack.c.h.b16 %v432
        %v780 = vunpack.c.l.b16 %v433
        %v781 = vunpack.c.h.b16 %v433
        %v782 = vunpack.c.l.b16 %v434
        %v783 = vunpack.c.h.b16 %v434
        %v784 = vunpack.c.l.b16 %v435
        %v785 = vunpack.c.h.b16 %v435
        %v786 = vunpack.c.l.b16 %v436
        %v787 = vunpack.c.h.b16 %v436
        %v788 = vunpack.c.l.b16 %v437
        %v789 = vunpack.c.h.b16 %v437
        %v790 = vunpack.c.l.b16 %v438
        %v791 = vunpack.c.h.b16 %v438
        %v792 = vunpack.c.l.b16 %v439
        %v793 = vunpack.c.h.b16 %v439
        %v794 = vunpack.c.l.b16 %v440
        %v795 = vunpack.c.h.b16 %v440
        %v796 = vunpack.c.l.b16 %v441
        %v797 = vunpack.c.h.b16 %v441
        %v798 = vunpack.c.l.b16 %v442
        %v799 = vunpack.c.h.b16 %v442
        %v800 = vunpack.c.l.b16 %v443
        %v801 = vunpack.c.h.b16 %v443
        %v802 = vunpack.c.l.b16 %v444
        %v803 = vunpack.c.h.b16 %v444
        %v804 = vunpack.c.l.b16 %v445
        %v805 = vunpack.c.h.b16 %v445
        %v806 = vunpack.c.l.b16 %v446
        %v807 = vunpack.c.h.b16 %v446
        %v808 = vunpack.c.l.b16 %v447
        %v809 = vunpack.c.h.b16 %v447
        %v810 = vunpack.c.l.b16 %v448
        %v811 = vunpack.c.h.b16 %v448
        %v812 = vunpack.c.l.b16 %v449
        %v813 = vunpack.c.h.b16 %v449
        %v814 = vunpack.c.l.b16 %v450
        %v815 = vunpack.c.h.b16 %v450
        %v816 = vunpack.c.l.b16 %v451
        %v817 = vunpack.c.h.b16 %v451
        %v818 = vunpack.c.l.b16 %v452
        %v819 = vunpack.c.h.b16 %v452
        %v820 = vunpack.c.l.b16 %v453
        %v821 = vunpack.c.h.b16 %v453
        %v822 = vunpack.c.l.b16 %v454
        %v823 = vunpack.c.h.b16 %v454
        %v824 = vunpack.c.l.b16 %v455
        %v825 = vunpack.c.h.b16 %v455
        %v826 = vunpack.c.l.b16 %v456
        %v827 = vunpack.c.h.b16 %v456
        %v828 = vunpack.c.l.b16 %v457
        %v829 = vunpack.c.h.b16 %v457
        %v830 = vunpack.c.l.b16 %v458
        %v831 = vunpack.c.h.b16 %v458
        %v832 = vunpack.c.l.b16 %v459
        %v833 = vunpack.c.h.b16 %v459
        %v834 = vunpack.c.l.b16 %v460
        %v835 = vunpack.c.h.b16 %v460
        %v836 = vunpack.c.l.b16 %v461
        %v837 = vunpack.c.h.b16 %v461
        %v838 = vunpack.c.l.b16 %v462
        %v839 = vunpack.c.h.b16 %v462
        %v840 = vunpack.c.l.b16 %v463
        %v841 = vunpack.c.h.b16 %v463
        %v842 = vunpack.c.l.b16 %v464
        %v843 = vunpack.c.h.b16 %v464
        %v844 = vunpack.c.l.b16 %v465
        %v845 = vunpack.c.h.b16 %v465
        %v846 = vunpack.c.l.b16 %v466
        %v847 = vunpack.c.h.b16 %v466
        %v848 = vunpack.c.l.b16 %v467
        %v849 = vunpack.c.h.b16 %v467
        %v850 = vunpack.c.l.b16 %v468
        %v851 = vunpack.c.h.b16 %v468
        %v852 = vunpack.c.l.b16 %v469
        %v853 = vunpack.c.h.b16 %v469
        %v854 = vunpack.c.l.b16 %v470
        %v855 = vunpack.c.h.b16 %v470
        %v856 = vunpack.c.l.b16 %v471
        %v857 = vunpack.c.h.b16 %v471
        %v858 = vunpack.c.l.b16 %v472
        %v859 = vunpack.c.h.b16 %v472
        %v860 = vunpack.c.l.b16 %v473
        %v861 = vunpack.c.h.b16 %v473
        %v862 = vunpack.c.l.b16 %v474
        %v863 = vunpack.c.h.b16 %v474
        %v864 = vunpack.c.l.b16 %v475
        %v865 = vunpack.c.h.b16 %v475
        %v866 = vunpack.c.l.b16 %v476
        %v867 = vunpack.c.h.b16 %v476
        %v868 = vunpack.c.l.b16 %v477
        %v869 = vunpack.c.h.b16 %v477
        %v870 = vunpack.c.l.b16 %v478
        %v871 = vunpack.c.h.b16 %v478
        %v872 = vunpack.c.l.b16 %v479
        %v873 = vunpack.c.h.b16 %v479
        %v874 = vunpack.c.l.b16 %v480
        %v875 = vunpack.c.h.b16 %v480
        %v876 = vunpack.c.l.b16 %v481
        %v877 = vunpack.c.h.b16 %v481
        %v878 = vunpack.c.l.b16 %v482
        %v879 = vunpack.c.h.b16 %v482
        %v880 = vunpack.c.l.b16 %v483
        %v881 = vunpack.c.h.b16 %v483
        %v882 = vunpack.c.l.b16 %v484
        %v883 = vunpack.c.h.b16 %v484
        %v884 = vunpack.c.l.b16 %v485
        %v885 = vunpack.c.h.b16 %v485
        %v886 = vunpack.c.l.b16 %v486
        %v887 = vunpack.c.h.b16 %v486
        %v888 = vunpack.c.l.b16 %v487
        %v889 = vunpack.c.h.b16 %v487
        %v890 = vunpack.c.l.b16 %v488
        %v891 = vunpack.c.h.b16 %v488
        %v892 = vunpack.c.l.b16 %v489
        %v893 = vunpack.c.h.b16 %v489
        %v894 = vunpack.c.l.b16 %v490
        %v895 = vunpack.c.h.b16 %v490
        %v896 = vunpack.c.l.b16 %v491
        %v897 = vunpack.c.h.b16 %v491
        %v898 = vpack.c.b16 %v646, %v642
        %v899 = vpack.c.b16 %v647, %v643
        %v900 = vpack.c.b16 %v648, %v644
        %v901 = vpack.c.b16 %v649, %v645
        %v902 = vpack.c.b16 %v654, %v650
        %v903 = vpack.c.b16 %v655, %v651
        %v904 = vpack.c.b16 %v656, %v652
        %v905 = vpack.c.b16 %v657, %v653
        %v906 = vpack.c.b16 %v662, %v658
        %v907 = vpack.c.b16 %v663, %v659
        %v908 = vpack.c.b16 %v664, %v660
        %v909 = vpack.c.b16 %v665, %v661
        %v910 = vpack.c.b16 %v670, %v666
        %v911 = vpack.c.b16 %v671, %v667
        %v912 = vpack.c.b16 %v672, %v668
        %v913 = vpack.c.b16 %v673, %v669
        %v914 = vpack.c.b16 %v678, %v674
        %v915 = vpack.c.b16 %v679, %v675
        %v916 = vpack.c.b16 %v680, %v676
        %v917 = vpack.c.b16 %v681, %v677
        %v918 = vpack.c.b16 %v686, %v682
        %v919 = vpack.c.b16 %v687, %v683
        %v920 = vpack.c.b16 %v688, %v684
        %v921 = vpack.c.b16 %v689, %v685
        %v922 = vpack.c.b16 %v694, %v690
        %v923 = vpack.c.b16 %v695, %v691
        %v924 = vpack.c.b16 %v696, %v692
        %v925 = vpack.c.b16 %v697, %v693
        %v926 = vpack.c.b16 %v702, %v698
        %v927 = vpack.c.b16 %v703, %v699
        %v928 = vpack.c.b16 %v704, %v700
        %v929 = vpack.c.b16 %v705, %v701
        %v930 = vpack.c.b16 %v710, %v706
        %v931 = vpack.c.b16 %v711, %v707
        %v932 = vpack.c.b16 %v712, %v708
        %v933 = vpack.c.b16 %v713, %v709
        %v934 = vpack.c.b16 %v718, %v714
        %v935 = vpack.c.b16 %v719, %v715
        %v936 = vpack.c.b16 %v720, %v716
        %v937 = vpack.c.b16 %v721, %v717
        %v938 = vpack.c.b16 %v726, %v722
        %v939 = vpack.c.b16 %v727, %v723
        %v940 = vpack.c.b16 %v728, %v724
        %v941 = vpack.c.b16 %v729, %v725
        %v942 = vpack.c.b16 %v734, %v730
        %v943 = vpack.c.b16 %v735, %v731
        %v944 = vpack.c.b16 %v736, %v732
        %v945 = vpack.c.b16 %v737, %v733
        %v946 = vpack.c.b16 %v742, %v738
        %v947 = vpack.c.b16 %v743, %v739
        %v948 = vpack.c.b16 %v744, %v740
        %v949 = vpack.c.b16 %v745, %v741
        %v950 = vpack.c.b16 %v750, %v746
        %v951 = vpack.c.b16 %v751, %v747
        %v952 = vpack.c.b16 %v752, %v748
        %v953 = vpack.c.b16 %v753, %v749
        %v954 = vpack.c.b16 %v758, %v754
        %v955 = vpack.c.b16 %v759, %v755
        %v956 = vpack.c.b16 %v760, %v756
        %v957 = vpack.c.b16 %v761, %v757
        %v958 = vpack.c.b16 %v766, %v762
        %v959 = vpack.c.b16 %v767, %v763
        %v960 = vpack.c.b16 %v768, %v764
        %v961 = vpack.c.b16 %v769, %v765
        %v962 = vpack.c.b16 %v774, %v770
        %v963 = vpack.c.b16 %v775, %v771
        %v964 = vpack.c.b16 %v776, %v772
        %v965 = vpack.c.b16 %v777, %v773
        %v966 = vpack.c.b16 %v782, %v778
        %v967 = vpack.c.b16 %v783, %v779
        %v968 = vpack.c.b16 %v784, %v780
        %v969 = vpack.c.b16 %v785, %v781
        %v970 = vpack.c.b16 %v790, %v786
        %v971 = vpack.c.b16 %v791, %v787
        %v972 = vpack.c.b16 %v792, %v788
        %v973 = vpack.c.b16 %v793, %v789
        %v974 = vpack.c.b16 %v798, %v794
        %v975 = vpack.c.b16 %v799, %v795
        %v976 = vpack.c.b16 %v800, %v796
        %v977 = vpack.c.b16 %v801, %v797
        %v978 = vpack.c.b16 %v806, %v802
        %v979 = vpack.c.b16 %v807, %v803
        %v980 = vpack.c.b16 %v808, %v804
        %v981 = vpack.c.b16 %v809, %v805
        %v982 = vpack.c.b16 %v814, %v810
        %v983 = vpack.c.b16 %v815, %v811
        %v984 = vpack.c.b16 %v816, %v812
        %v985 = vpack.c.b16 %v817, %v813
        %v986 = vpack.c.b16 %v822, %v818
        %v987 = vpack.c.b16 %v823, %v819
        %v988 = vpack.c.b16 %v824, %v820
        %v989 = vpack.c.b16 %v825, %v821
        %v990 = vpack.c.b16 %v830, %v826
        %v991 = vpack.c.b16 %v831, %v827
        %v992 = vpack.c.b16 %v832, %v828
        %v993 = vpack.c.b16 %v833, %v829
        %v994 = vpack.c.b16 %v838, %v834
        %v995 = vpack.c.b16 %v839, %v835
        %v996 = vpack.c.b16 %v840, %v836
        %v997 = vpack.c.b16 %v841, %v837
        %v998 = vpack.c.b16 %v846, %v842
        %v999 = vpack.c.b16 %v847, %v843
        %v1000 = vpack.c.b16 %v848, %v844
        %v1001 = vpack.c.b16 %v849, %v845
        %v1002 = vpack.c.b16 %v854, %v850
        %v1003 = vpack.c.b16 %v855, %v851
        %v1004 = vpack.c.b16 %v856, %v852
        %v1005 = vpack.c.b16 %v857, %v853
        %v1006 = vpack.c.b16 %v862, %v858
        %v1007 = vpack.c.b16 %v863, %v859
        %v1008 = vpack.c.b16 %v864, %v860
        %v1009 = vpack.c.b16 %v865, %v861
        %v1010 = vpack.c.b16 %v870, %v866
        %v1011 = vpack.c.b16 %v871, %v867
        %v1012 = vpack.c.b16 %v872, %v868
        %v1013 = vpack.c.b16 %v873, %v869
        %v1014 = vpack.c.b16 %v878, %v874
        %v1015 = vpack.c.b16 %v879, %v875
        %v1016 = vpack.c.b16 %v880, %v876
        %v1017 = vpack.c.b16 %v881, %v877
        %v1018 = vpack.c.b16 %v886, %v882
        %v1019 = vpack.c.b16 %v887, %v883
        %v1020 = vpack.c.b16 %v888, %v884
        %v1021 = vpack.c.b16 %v889, %v885
        %v1022 = vpack.c.b16 %v894, %v890
        %v1023 = vpack.c.b16 %v895, %v891
        %v1024 = vpack.c.b16 %v896, %v892
        %v1025 = vpack.c.b16 %v897, %v893
        %1154 = vmatprep.subr.bf16.mxu0 %v927
        %1155 = vmatpush1.bf16.msra.mxu0 %v926
        %1156 = vmatprep.subr.bf16.mxu0 %v923
        %1157 = vmatpush1.bf16.msra.mxu0 %v922
        %1158 = vmatprep.subr.bf16.mxu0 %v919
        %1159 = vmatpush1.bf16.msra.mxu0 %v918
        %1160 = vmatprep.subr.bf16.mxu0 %v915
        %1161 = vmatpush1.bf16.msra.mxu0 %v914
        %1162 = vmatprep.subr.bf16.mxu0 %v911
        %1163 = vmatpush1.bf16.msra.mxu0 %v910
        %1164 = vmatprep.subr.bf16.mxu0 %v907
        %1165 = vmatpush1.bf16.msra.mxu0 %v906
        %1166 = vmatprep.subr.bf16.mxu0 %v903
        %1167 = vmatpush1.bf16.msra.mxu0 %v902
        %1168 = vmatprep.subr.bf16.mxu0 %v899
        %1169 = vmatpush1.bf16.msra.mxu0 %v898
        %1170 = vmatprep.subr.bf16.mxu0 %v959
        %1171 = vmatpush2.bf16.msra.mxu0 %v958
        %1172 = vmatprep.subr.bf16.mxu0 %v955
        %1173 = vmatpush2.bf16.msra.mxu0 %v954
        %1174 = vmatprep.subr.bf16.mxu0 %v951
        %1175 = vmatpush2.bf16.msra.mxu0 %v950
        %1176 = vmatprep.subr.bf16.mxu0 %v947
        %1177 = vmatpush2.bf16.msra.mxu0 %v946
        %1178 = vmatprep.subr.bf16.mxu0 %v943
        %1179 = vmatpush2.bf16.msra.mxu0 %v942
        %1180 = vmatprep.subr.bf16.mxu0 %v939
        %1181 = vmatpush2.bf16.msra.mxu0 %v938
        %1182 = vmatprep.subr.bf16.mxu0 %v935
        %1183 = vmatpush2.bf16.msra.mxu0 %v934
        %1184 = vmatprep.subr.bf16.mxu0 %v931
        %1185 = vmatpush2.bf16.msra.mxu0 %v930
        %1186 = vmatprep.mubr.bf16.mxu0 %v333
        %1187 = vmatmul.mubr.bf16.gmra.mxu0 %v332
        %v1188 = vpop.f32.mrf.mxu0
        %v1189 = vadd.f32 %v497, %v1188
        %v1190 = vpop.f32.mrf.mxu0
        %v1191 = vadd.f32 %v501, %v1190
        %v1192 = vpop.f32.mrf.mxu0
        %v1193 = vadd.f32 %v497, %v1192
        %v1194 = vpop.f32.mrf.mxu0
        %v1195 = vadd.f32 %v501, %v1194
        %1196 = vmatprep.mubr.bf16.mxu0 %v337
        %1197 = vmatmul.mubr.bf16.gmra.mxu0 %v336
        %v1198 = vpop.f32.mrf.mxu0
        %v1199 = vadd.f32 %v497, %v1198
        %v1200 = vpop.f32.mrf.mxu0
        %v1201 = vadd.f32 %v501, %v1200
        %v1202 = vpop.f32.mrf.mxu0
        %v1203 = vadd.f32 %v497, %v1202
        %v1204 = vpop.f32.mrf.mxu0
        %v1205 = vadd.f32 %v501, %v1204
        %1206 = vmatprep.mubr.bf16.mxu0 %v341
        %1207 = vmatmul.mubr.bf16.gmra.mxu0 %v340
        %v1208 = vpop.f32.mrf.mxu0
        %v1209 = vadd.f32 %v497, %v1208
        %v1210 = vpop.f32.mrf.mxu0
        %v1211 = vadd.f32 %v501, %v1210
        %v1212 = vpop.f32.mrf.mxu0
        %v1213 = vadd.f32 %v497, %v1212
        %v1214 = vpop.f32.mrf.mxu0
        %v1215 = vadd.f32 %v501, %v1214
        %1216 = vmatprep.mubr.bf16.mxu0 %v345
        %1217 = vmatmul.mubr.bf16.gmra.mxu0 %v344
        %v1218 = vpop.f32.mrf.mxu0
        %v1219 = vadd.f32 %v497, %v1218
        %v1220 = vpop.f32.mrf.mxu0
        %v1221 = vadd.f32 %v501, %v1220
        %v1222 = vpop.f32.mrf.mxu0
        %v1223 = vadd.f32 %v497, %v1222
        %v1224 = vpop.f32.mrf.mxu0
        %v1225 = vadd.f32 %v501, %v1224
        %1226 = vmatprep.mubr.bf16.mxu0 %v349
        %1227 = vmatmul.mubr.bf16.gmra.mxu0 %v348
        %v1228 = vpop.f32.mrf.mxu0
        %v1229 = vadd.f32 %v497, %v1228
        %v1230 = vpop.f32.mrf.mxu0
        %v1231 = vadd.f32 %v501, %v1230
        %v1232 = vpop.f32.mrf.mxu0
        %v1233 = vadd.f32 %v497, %v1232
        %v1234 = vpop.f32.mrf.mxu0
        %v1235 = vadd.f32 %v501, %v1234
        %1236 = vmatprep.mubr.bf16.mxu0 %v353
        %1237 = vmatmul.mubr.bf16.gmra.mxu0 %v352
        %v1238 = vpop.f32.mrf.mxu0
        %v1239 = vadd.f32 %v497, %v1238
        %v1240 = vpop.f32.mrf.mxu0
        %v1241 = vadd.f32 %v501, %v1240
        %v1242 = vpop.f32.mrf.mxu0
        %v1243 = vadd.f32 %v497, %v1242
        %v1244 = vpop.f32.mrf.mxu0
        %v1245 = vadd.f32 %v501, %v1244
        %1246 = vmatprep.mubr.bf16.mxu0 %v357
        %1247 = vmatmul.mubr.bf16.gmra.mxu0 %v356
        %v1248 = vpop.f32.mrf.mxu0
        %v1249 = vadd.f32 %v497, %v1248
        %v1250 = vpop.f32.mrf.mxu0
        %v1251 = vadd.f32 %v501, %v1250
        %v1252 = vpop.f32.mrf.mxu0
        %v1253 = vadd.f32 %v497, %v1252
        %v1254 = vpop.f32.mrf.mxu0
        %v1255 = vadd.f32 %v501, %v1254
        %1256 = vmatprep.mubr.bf16.mxu0 %v361
        %1257 = vmatmul.mubr.bf16.gmra.mxu0 %v360
        %v1258 = vpop.f32.mrf.mxu0
        %v1259 = vadd.f32 %v497, %v1258
        %v1260 = vpop.f32.mrf.mxu0
        %v1261 = vadd.f32 %v501, %v1260
        %v1262 = vpop.f32.mrf.mxu0
        %v1263 = vadd.f32 %v497, %v1262
        %v1264 = vpop.f32.mrf.mxu0
        %v1265 = vadd.f32 %v501, %v1264
        %1266 = vdwg.mxu0
        %1267 = vmatprep.subr.bf16.mxu0 %v991
        %1268 = vmatpush1.bf16.msra.mxu0 %v990
        %1269 = vmatprep.subr.bf16.mxu0 %v987
        %1270 = vmatpush1.bf16.msra.mxu0 %v986
        %1271 = vmatprep.subr.bf16.mxu0 %v983
        %1272 = vmatpush1.bf16.msra.mxu0 %v982
        %1273 = vmatprep.subr.bf16.mxu0 %v979
        %1274 = vmatpush1.bf16.msra.mxu0 %v978
        %1275 = vmatprep.subr.bf16.mxu0 %v975
        %1276 = vmatpush1.bf16.msra.mxu0 %v974
        %1277 = vmatprep.subr.bf16.mxu0 %v971
        %1278 = vmatpush1.bf16.msra.mxu0 %v970
        %1279 = vmatprep.subr.bf16.mxu0 %v967
        %1280 = vmatpush1.bf16.msra.mxu0 %v966
        %1281 = vmatprep.subr.bf16.mxu0 %v963
        %1282 = vmatpush1.bf16.msra.mxu0 %v962
        %1283 = vmatprep.subr.bf16.mxu0 %v1023
        %1284 = vmatpush2.bf16.msra.mxu0 %v1022
        %1285 = vmatprep.subr.bf16.mxu0 %v1019
        %1286 = vmatpush2.bf16.msra.mxu0 %v1018
        %1287 = vmatprep.subr.bf16.mxu0 %v1015
        %1288 = vmatpush2.bf16.msra.mxu0 %v1014
        %1289 = vmatprep.subr.bf16.mxu0 %v1011
        %1290 = vmatpush2.bf16.msra.mxu0 %v1010
        %1291 = vmatprep.subr.bf16.mxu0 %v1007
        %1292 = vmatpush2.bf16.msra.mxu0 %v1006
        %1293 = vmatprep.subr.bf16.mxu0 %v1003
        %1294 = vmatpush2.bf16.msra.mxu0 %v1002
        %1295 = vmatprep.subr.bf16.mxu0 %v999
        %1296 = vmatpush2.bf16.msra.mxu0 %v998
        %1297 = vmatprep.subr.bf16.mxu0 %v995
        %1298 = vmatpush2.bf16.msra.mxu0 %v994
        %1299 = vmatprep.mubr.bf16.mxu0 %v335
        %1300 = vmatmul.mubr.bf16.gmra.mxu0 %v334
        %v1301 = vpop.f32.mrf.mxu0
        %v1302 = vadd.f32 %v1189, %v1301
        %v1303 = vpop.f32.mrf.mxu0
        %v1304 = vadd.f32 %v1191, %v1303
        %v1305 = vpop.f32.mrf.mxu0
        %v1306 = vadd.f32 %v1193, %v1305
        %v1307 = vpop.f32.mrf.mxu0
        %v1308 = vadd.f32 %v1195, %v1307
        %1309 = vmatprep.mubr.bf16.mxu0 %v339
        %1310 = vmatmul.mubr.bf16.gmra.mxu0 %v338
        %v1311 = vpop.f32.mrf.mxu0
        %v1312 = vadd.f32 %v1199, %v1311
        %v1313 = vpop.f32.mrf.mxu0
        %v1314 = vadd.f32 %v1201, %v1313
        %v1315 = vpop.f32.mrf.mxu0
        %v1316 = vadd.f32 %v1203, %v1315
        %v1317 = vpop.f32.mrf.mxu0
        %v1318 = vadd.f32 %v1205, %v1317
        %1319 = vmatprep.mubr.bf16.mxu0 %v343
        %1320 = vmatmul.mubr.bf16.gmra.mxu0 %v342
        %v1321 = vpop.f32.mrf.mxu0
        %v1322 = vadd.f32 %v1209, %v1321
        %v1323 = vpop.f32.mrf.mxu0
        %v1324 = vadd.f32 %v1211, %v1323
        %v1325 = vpop.f32.mrf.mxu0
        %v1326 = vadd.f32 %v1213, %v1325
        %v1327 = vpop.f32.mrf.mxu0
        %v1328 = vadd.f32 %v1215, %v1327
        %1329 = vmatprep.mubr.bf16.mxu0 %v347
        %1330 = vmatmul.mubr.bf16.gmra.mxu0 %v346
        %v1331 = vpop.f32.mrf.mxu0
        %v1332 = vadd.f32 %v1219, %v1331
        %v1333 = vpop.f32.mrf.mxu0
        %v1334 = vadd.f32 %v1221, %v1333
        %v1335 = vpop.f32.mrf.mxu0
        %v1336 = vadd.f32 %v1223, %v1335
        %v1337 = vpop.f32.mrf.mxu0
        %v1338 = vadd.f32 %v1225, %v1337
        %1339 = vmatprep.mubr.bf16.mxu0 %v351
        %1340 = vmatmul.mubr.bf16.gmra.mxu0 %v350
        %v1341 = vpop.f32.mrf.mxu0
        %v1342 = vadd.f32 %v1229, %v1341
        %v1343 = vpop.f32.mrf.mxu0
        %v1344 = vadd.f32 %v1231, %v1343
        %v1345 = vpop.f32.mrf.mxu0
        %v1346 = vadd.f32 %v1233, %v1345
        %v1347 = vpop.f32.mrf.mxu0
        %v1348 = vadd.f32 %v1235, %v1347
        %1349 = vmatprep.mubr.bf16.mxu0 %v355
        %1350 = vmatmul.mubr.bf16.gmra.mxu0 %v354
        %v1351 = vpop.f32.mrf.mxu0
        %v1352 = vadd.f32 %v1239, %v1351
        %v1353 = vpop.f32.mrf.mxu0
        %v1354 = vadd.f32 %v1241, %v1353
        %v1355 = vpop.f32.mrf.mxu0
        %v1356 = vadd.f32 %v1243, %v1355
        %v1357 = vpop.f32.mrf.mxu0
        %v1358 = vadd.f32 %v1245, %v1357
        %1359 = vmatprep.mubr.bf16.mxu0 %v359
        %1360 = vmatmul.mubr.bf16.gmra.mxu0 %v358
        %v1361 = vpop.f32.mrf.mxu0
        %v1362 = vadd.f32 %v1249, %v1361
        %v1363 = vpop.f32.mrf.mxu0
        %v1364 = vadd.f32 %v1251, %v1363
        %v1365 = vpop.f32.mrf.mxu0
        %v1366 = vadd.f32 %v1253, %v1365
        %v1367 = vpop.f32.mrf.mxu0
        %v1368 = vadd.f32 %v1255, %v1367
        %1369 = vmatprep.mubr.bf16.mxu0 %v363
        %1370 = vmatmul.mubr.bf16.gmra.mxu0 %v362
        %v1371 = vpop.f32.mrf.mxu0
        %v1372 = vadd.f32 %v1259, %v1371
        %v1373 = vpop.f32.mrf.mxu0
        %v1374 = vadd.f32 %v1261, %v1373
        %v1375 = vpop.f32.mrf.mxu0
        %v1376 = vadd.f32 %v1263, %v1375
        %v1377 = vpop.f32.mrf.mxu0
        %v1378 = vadd.f32 %v1265, %v1377
        %1379 = vdwg.mxu0
        %1380 = vmatprep.subr.bf16.mxu0 %v929
        %1381 = vmatpush1.bf16.msra.mxu0 %v928
        %1382 = vmatprep.subr.bf16.mxu0 %v925
        %1383 = vmatpush1.bf16.msra.mxu0 %v924
        %1384 = vmatprep.subr.bf16.mxu0 %v921
        %1385 = vmatpush1.bf16.msra.mxu0 %v920
        %1386 = vmatprep.subr.bf16.mxu0 %v917
        %1387 = vmatpush1.bf16.msra.mxu0 %v916
        %1388 = vmatprep.subr.bf16.mxu0 %v913
        %1389 = vmatpush1.bf16.msra.mxu0 %v912
        %1390 = vmatprep.subr.bf16.mxu0 %v909
        %1391 = vmatpush1.bf16.msra.mxu0 %v908
        %1392 = vmatprep.subr.bf16.mxu0 %v905
        %1393 = vmatpush1.bf16.msra.mxu0 %v904
        %1394 = vmatprep.subr.bf16.mxu0 %v901
        %1395 = vmatpush1.bf16.msra.mxu0 %v900
        %1396 = vmatprep.subr.bf16.mxu0 %v961
        %1397 = vmatpush2.bf16.msra.mxu0 %v960
        %1398 = vmatprep.subr.bf16.mxu0 %v957
        %1399 = vmatpush2.bf16.msra.mxu0 %v956
        %1400 = vmatprep.subr.bf16.mxu0 %v953
        %1401 = vmatpush2.bf16.msra.mxu0 %v952
        %1402 = vmatprep.subr.bf16.mxu0 %v949
        %1403 = vmatpush2.bf16.msra.mxu0 %v948
        %1404 = vmatprep.subr.bf16.mxu0 %v945
        %1405 = vmatpush2.bf16.msra.mxu0 %v944
        %1406 = vmatprep.subr.bf16.mxu0 %v941
        %1407 = vmatpush2.bf16.msra.mxu0 %v940
        %1408 = vmatprep.subr.bf16.mxu0 %v937
        %1409 = vmatpush2.bf16.msra.mxu0 %v936
        %1410 = vmatprep.subr.bf16.mxu0 %v933
        %1411 = vmatpush2.bf16.msra.mxu0 %v932
        %1412 = vmatprep.mubr.bf16.mxu0 %v333
        %1413 = vmatmul.mubr.bf16.gmra.mxu0 %v332
        %v1414 = vpop.f32.mrf.mxu0
        %v1415 = vadd.f32 %v505, %v1414
        %v1416 = vpop.f32.mrf.mxu0
        %v1417 = vadd.f32 %v509, %v1416
        %v1418 = vpop.f32.mrf.mxu0
        %v1419 = vadd.f32 %v505, %v1418
        %v1420 = vpop.f32.mrf.mxu0
        %v1421 = vadd.f32 %v509, %v1420
        %1422 = vmatprep.mubr.bf16.mxu0 %v337
        %1423 = vmatmul.mubr.bf16.gmra.mxu0 %v336
        %v1424 = vpop.f32.mrf.mxu0
        %v1425 = vadd.f32 %v505, %v1424
        %v1426 = vpop.f32.mrf.mxu0
        %v1427 = vadd.f32 %v509, %v1426
        %v1428 = vpop.f32.mrf.mxu0
        %v1429 = vadd.f32 %v505, %v1428
        %v1430 = vpop.f32.mrf.mxu0
        %v1431 = vadd.f32 %v509, %v1430
        %1432 = vmatprep.mubr.bf16.mxu0 %v341
        %1433 = vmatmul.mubr.bf16.gmra.mxu0 %v340
        %v1434 = vpop.f32.mrf.mxu0
        %v1435 = vadd.f32 %v505, %v1434
        %v1436 = vpop.f32.mrf.mxu0
        %v1437 = vadd.f32 %v509, %v1436
        %v1438 = vpop.f32.mrf.mxu0
        %v1439 = vadd.f32 %v505, %v1438
        %v1440 = vpop.f32.mrf.mxu0
        %v1441 = vadd.f32 %v509, %v1440
        %1442 = vmatprep.mubr.bf16.mxu0 %v345
        %1443 = vmatmul.mubr.bf16.gmra.mxu0 %v344
        %v1444 = vpop.f32.mrf.mxu0
        %v1445 = vadd.f32 %v505, %v1444
        %v1446 = vpop.f32.mrf.mxu0
        %v1447 = vadd.f32 %v509, %v1446
        %v1448 = vpop.f32.mrf.mxu0
        %v1449 = vadd.f32 %v505, %v1448
        %v1450 = vpop.f32.mrf.mxu0
        %v1451 = vadd.f32 %v509, %v1450
        %1452 = vmatprep.mubr.bf16.mxu0 %v349
        %1453 = vmatmul.mubr.bf16.gmra.mxu0 %v348
        %v1454 = vpop.f32.mrf.mxu0
        %v1455 = vadd.f32 %v505, %v1454
        %v1456 = vpop.f32.mrf.mxu0
        %v1457 = vadd.f32 %v509, %v1456
        %v1458 = vpop.f32.mrf.mxu0
        %v1459 = vadd.f32 %v505, %v1458
        %v1460 = vpop.f32.mrf.mxu0
        %v1461 = vadd.f32 %v509, %v1460
        %1462 = vmatprep.mubr.bf16.mxu0 %v353
        %1463 = vmatmul.mubr.bf16.gmra.mxu0 %v352
        %v1464 = vpop.f32.mrf.mxu0
        %v1465 = vadd.f32 %v505, %v1464
        %v1466 = vpop.f32.mrf.mxu0
        %v1467 = vadd.f32 %v509, %v1466
        %v1468 = vpop.f32.mrf.mxu0
        %v1469 = vadd.f32 %v505, %v1468
        %v1470 = vpop.f32.mrf.mxu0
        %v1471 = vadd.f32 %v509, %v1470
        %1472 = vmatprep.mubr.bf16.mxu0 %v357
        %1473 = vmatmul.mubr.bf16.gmra.mxu0 %v356
        %v1474 = vpop.f32.mrf.mxu0
        %v1475 = vadd.f32 %v505, %v1474
        %v1476 = vpop.f32.mrf.mxu0
        %v1477 = vadd.f32 %v509, %v1476
        %v1478 = vpop.f32.mrf.mxu0
        %v1479 = vadd.f32 %v505, %v1478
        %v1480 = vpop.f32.mrf.mxu0
        %v1481 = vadd.f32 %v509, %v1480
        %1482 = vmatprep.mubr.bf16.mxu0 %v361
        %1483 = vmatmul.mubr.bf16.gmra.mxu0 %v360
        %v1484 = vpop.f32.mrf.mxu0
        %v1485 = vadd.f32 %v505, %v1484
        %v1486 = vpop.f32.mrf.mxu0
        %v1487 = vadd.f32 %v509, %v1486
        %v1488 = vpop.f32.mrf.mxu0
        %v1489 = vadd.f32 %v505, %v1488
        %v1490 = vpop.f32.mrf.mxu0
        %v1491 = vadd.f32 %v509, %v1490
        %1492 = vdwg.mxu0
        %1493 = vmatprep.subr.bf16.mxu0 %v993
        %1494 = vmatpush1.bf16.msra.mxu0 %v992
        %1495 = vmatprep.subr.bf16.mxu0 %v989
        %1496 = vmatpush1.bf16.msra.mxu0 %v988
        %1497 = vmatprep.subr.bf16.mxu0 %v985
        %1498 = vmatpush1.bf16.msra.mxu0 %v984
        %1499 = vmatprep.subr.bf16.mxu0 %v981
        %1500 = vmatpush1.bf16.msra.mxu0 %v980
        %1501 = vmatprep.subr.bf16.mxu0 %v977
        %1502 = vmatpush1.bf16.msra.mxu0 %v976
        %1503 = vmatprep.subr.bf16.mxu0 %v973
        %1504 = vmatpush1.bf16.msra.mxu0 %v972
        %1505 = vmatprep.subr.bf16.mxu0 %v969
        %1506 = vmatpush1.bf16.msra.mxu0 %v968
        %1507 = vmatprep.subr.bf16.mxu0 %v965
        %1508 = vmatpush1.bf16.msra.mxu0 %v964
        %1509 = vmatprep.subr.bf16.mxu0 %v1025
        %1510 = vmatpush2.bf16.msra.mxu0 %v1024
        %1511 = vmatprep.subr.bf16.mxu0 %v1021
        %1512 = vmatpush2.bf16.msra.mxu0 %v1020
        %1513 = vmatprep.subr.bf16.mxu0 %v1017
        %1514 = vmatpush2.bf16.msra.mxu0 %v1016
        %1515 = vmatprep.subr.bf16.mxu0 %v1013
        %1516 = vmatpush2.bf16.msra.mxu0 %v1012
        %1517 = vmatprep.subr.bf16.mxu0 %v1009
        %1518 = vmatpush2.bf16.msra.mxu0 %v1008
        %1519 = vmatprep.subr.bf16.mxu0 %v1005
        %1520 = vmatpush2.bf16.msra.mxu0 %v1004
        %1521 = vmatprep.subr.bf16.mxu0 %v1001
        %1522 = vmatpush2.bf16.msra.mxu0 %v1000
        %1523 = vmatprep.subr.bf16.mxu0 %v997
        %1524 = vmatpush2.bf16.msra.mxu0 %v996
        %1525 = vmatprep.mubr.bf16.mxu0 %v335
        %1526 = vmatmul.mubr.bf16.gmra.mxu0 %v334
        %v1527 = vpop.f32.mrf.mxu0
        %v1528 = vadd.f32 %v1415, %v1527
        %v1529 = vpop.f32.mrf.mxu0
        %v1530 = vadd.f32 %v1417, %v1529
        %v1531 = vpop.f32.mrf.mxu0
        %v1532 = vadd.f32 %v1419, %v1531
        %v1533 = vpop.f32.mrf.mxu0
        %v1534 = vadd.f32 %v1421, %v1533
        %1535 = vmatprep.mubr.bf16.mxu0 %v339
        %1536 = vmatmul.mubr.bf16.gmra.mxu0 %v338
        %v1537 = vpop.f32.mrf.mxu0
        %v1538 = vadd.f32 %v1425, %v1537
        %v1539 = vpop.f32.mrf.mxu0
        %v1540 = vadd.f32 %v1427, %v1539
        %v1541 = vpop.f32.mrf.mxu0
        %v1542 = vadd.f32 %v1429, %v1541
        %v1543 = vpop.f32.mrf.mxu0
        %v1544 = vadd.f32 %v1431, %v1543
        %1545 = vmatprep.mubr.bf16.mxu0 %v343
        %1546 = vmatmul.mubr.bf16.gmra.mxu0 %v342
        %v1547 = vpop.f32.mrf.mxu0
        %v1548 = vadd.f32 %v1435, %v1547
        %v1549 = vpop.f32.mrf.mxu0
        %v1550 = vadd.f32 %v1437, %v1549
        %v1551 = vpop.f32.mrf.mxu0
        %v1552 = vadd.f32 %v1439, %v1551
        %v1553 = vpop.f32.mrf.mxu0
        %v1554 = vadd.f32 %v1441, %v1553
        %1555 = vmatprep.mubr.bf16.mxu0 %v347
        %1556 = vmatmul.mubr.bf16.gmra.mxu0 %v346
        %v1557 = vpop.f32.mrf.mxu0
        %v1558 = vadd.f32 %v1445, %v1557
        %v1559 = vpop.f32.mrf.mxu0
        %v1560 = vadd.f32 %v1447, %v1559
        %v1561 = vpop.f32.mrf.mxu0
        %v1562 = vadd.f32 %v1449, %v1561
        %v1563 = vpop.f32.mrf.mxu0
        %v1564 = vadd.f32 %v1451, %v1563
        %1565 = vmatprep.mubr.bf16.mxu0 %v351
        %1566 = vmatmul.mubr.bf16.gmra.mxu0 %v350
        %v1567 = vpop.f32.mrf.mxu0
        %v1568 = vadd.f32 %v1455, %v1567
        %v1569 = vpop.f32.mrf.mxu0
        %v1570 = vadd.f32 %v1457, %v1569
        %v1571 = vpop.f32.mrf.mxu0
        %v1572 = vadd.f32 %v1459, %v1571
        %v1573 = vpop.f32.mrf.mxu0
        %v1574 = vadd.f32 %v1461, %v1573
        %1575 = vmatprep.mubr.bf16.mxu0 %v355
        %1576 = vmatmul.mubr.bf16.gmra.mxu0 %v354
        %v1577 = vpop.f32.mrf.mxu0
        %v1578 = vadd.f32 %v1465, %v1577
        %v1579 = vpop.f32.mrf.mxu0
        %v1580 = vadd.f32 %v1467, %v1579
        %v1581 = vpop.f32.mrf.mxu0
        %v1582 = vadd.f32 %v1469, %v1581
        %v1583 = vpop.f32.mrf.mxu0
        %v1584 = vadd.f32 %v1471, %v1583
        %1585 = vmatprep.mubr.bf16.mxu0 %v359
        %1586 = vmatmul.mubr.bf16.gmra.mxu0 %v358
        %v1587 = vpop.f32.mrf.mxu0
        %v1588 = vadd.f32 %v1475, %v1587
        %v1589 = vpop.f32.mrf.mxu0
        %v1590 = vadd.f32 %v1477, %v1589
        %v1591 = vpop.f32.mrf.mxu0
        %v1592 = vadd.f32 %v1479, %v1591
        %v1593 = vpop.f32.mrf.mxu0
        %v1594 = vadd.f32 %v1481, %v1593
        %1595 = vmatprep.mubr.bf16.mxu0 %v363
        %1596 = vmatmul.mubr.bf16.gmra.mxu0 %v362
        %v1597 = vpop.f32.mrf.mxu0
        %v1598 = vadd.f32 %v1485, %v1597
        %v1599 = vpop.f32.mrf.mxu0
        %v1600 = vadd.f32 %v1487, %v1599
        %v1601 = vpop.f32.mrf.mxu0
        %v1602 = vadd.f32 %v1489, %v1601
        %v1603 = vpop.f32.mrf.mxu0
        %v1604 = vadd.f32 %v1491, %v1603
        %1605 = vdwg.mxu0
        %v1606 = vmul.f32 %v1302, %v1302
        %v1607 = vmul.f32 %v1304, %v1304
        %v1608 = vmul.f32 %v1528, %v1528
        %v1609 = vmul.f32 %v1530, %v1530
        %v1610 = vmul.f32 %v1306, %v1306
        %v1611 = vmul.f32 %v1308, %v1308
        %v1612 = vmul.f32 %v1532, %v1532
        %v1613 = vmul.f32 %v1534, %v1534
        %v1614 = vmul.f32 %v1312, %v1312
        %v1615 = vmul.f32 %v1314, %v1314
        %v1616 = vmul.f32 %v1538, %v1538
        %v1617 = vmul.f32 %v1540, %v1540
        %v1618 = vmul.f32 %v1316, %v1316
        %v1619 = vmul.f32 %v1318, %v1318
        %v1620 = vmul.f32 %v1542, %v1542
        %v1621 = vmul.f32 %v1544, %v1544
        %v1622 = vmul.f32 %v1322, %v1322
        %v1623 = vmul.f32 %v1324, %v1324
        %v1624 = vmul.f32 %v1548, %v1548
        %v1625 = vmul.f32 %v1550, %v1550
        %v1626 = vmul.f32 %v1326, %v1326
        %v1627 = vmul.f32 %v1328, %v1328
        %v1628 = vmul.f32 %v1552, %v1552
        %v1629 = vmul.f32 %v1554, %v1554
        %v1630 = vmul.f32 %v1332, %v1332
        %v1631 = vmul.f32 %v1334, %v1334
        %v1632 = vmul.f32 %v1558, %v1558
        %v1633 = vmul.f32 %v1560, %v1560
        %v1634 = vmul.f32 %v1336, %v1336
        %v1635 = vmul.f32 %v1338, %v1338
        %v1636 = vmul.f32 %v1562, %v1562
        %v1637 = vmul.f32 %v1564, %v1564
        %v1638 = vmul.f32 %v1342, %v1342
        %v1639 = vmul.f32 %v1344, %v1344
        %v1640 = vmul.f32 %v1568, %v1568
        %v1641 = vmul.f32 %v1570, %v1570
        %v1642 = vmul.f32 %v1346, %v1346
        %v1643 = vmul.f32 %v1348, %v1348
        %v1644 = vmul.f32 %v1572, %v1572
        %v1645 = vmul.f32 %v1574, %v1574
        %v1646 = vmul.f32 %v1352, %v1352
        %v1647 = vmul.f32 %v1354, %v1354
        %v1648 = vmul.f32 %v1578, %v1578
        %v1649 = vmul.f32 %v1580, %v1580
        %v1650 = vmul.f32 %v1356, %v1356
        %v1651 = vmul.f32 %v1358, %v1358
        %v1652 = vmul.f32 %v1582, %v1582
        %v1653 = vmul.f32 %v1584, %v1584
        %v1654 = vmul.f32 %v1362, %v1362
        %v1655 = vmul.f32 %v1364, %v1364
        %v1656 = vmul.f32 %v1588, %v1588
        %v1657 = vmul.f32 %v1590, %v1590
        %v1658 = vmul.f32 %v1366, %v1366
        %v1659 = vmul.f32 %v1368, %v1368
        %v1660 = vmul.f32 %v1592, %v1592
        %v1661 = vmul.f32 %v1594, %v1594
        %v1662 = vmul.f32 %v1372, %v1372
        %v1663 = vmul.f32 %v1374, %v1374
        %v1664 = vmul.f32 %v1598, %v1598
        %v1665 = vmul.f32 %v1600, %v1600
        %v1666 = vmul.f32 %v1376, %v1376
        %v1667 = vmul.f32 %v1378, %v1378
        %v1668 = vmul.f32 %v1602, %v1602
        %v1669 = vmul.f32 %v1604, %v1604
        %v1670 = vmul.f32 %v1302, %v1606
        %v1671 = vmul.f32 %v1304, %v1607
        %v1672 = vmul.f32 %v1528, %v1608
        %v1673 = vmul.f32 %v1530, %v1609
        %v1674 = vmul.f32 %v1306, %v1610
        %v1675 = vmul.f32 %v1308, %v1611
        %v1676 = vmul.f32 %v1532, %v1612
        %v1677 = vmul.f32 %v1534, %v1613
        %v1678 = vmul.f32 %v1312, %v1614
        %v1679 = vmul.f32 %v1314, %v1615
        %v1680 = vmul.f32 %v1538, %v1616
        %v1681 = vmul.f32 %v1540, %v1617
        %v1682 = vmul.f32 %v1316, %v1618
        %v1683 = vmul.f32 %v1318, %v1619
        %v1684 = vmul.f32 %v1542, %v1620
        %v1685 = vmul.f32 %v1544, %v1621
        %v1686 = vmul.f32 %v1322, %v1622
        %v1687 = vmul.f32 %v1324, %v1623
        %v1688 = vmul.f32 %v1548, %v1624
        %v1689 = vmul.f32 %v1550, %v1625
        %v1690 = vmul.f32 %v1326, %v1626
        %v1691 = vmul.f32 %v1328, %v1627
        %v1692 = vmul.f32 %v1552, %v1628
        %v1693 = vmul.f32 %v1554, %v1629
        %v1694 = vmul.f32 %v1332, %v1630
        %v1695 = vmul.f32 %v1334, %v1631
        %v1696 = vmul.f32 %v1558, %v1632
        %v1697 = vmul.f32 %v1560, %v1633
        %v1698 = vmul.f32 %v1336, %v1634
        %v1699 = vmul.f32 %v1338, %v1635
        %v1700 = vmul.f32 %v1562, %v1636
        %v1701 = vmul.f32 %v1564, %v1637
        %v1702 = vmul.f32 %v1342, %v1638
        %v1703 = vmul.f32 %v1344, %v1639
        %v1704 = vmul.f32 %v1568, %v1640
        %v1705 = vmul.f32 %v1570, %v1641
        %v1706 = vmul.f32 %v1346, %v1642
        %v1707 = vmul.f32 %v1348, %v1643
        %v1708 = vmul.f32 %v1572, %v1644
        %v1709 = vmul.f32 %v1574, %v1645
        %v1710 = vmul.f32 %v1352, %v1646
        %v1711 = vmul.f32 %v1354, %v1647
        %v1712 = vmul.f32 %v1578, %v1648
        %v1713 = vmul.f32 %v1580, %v1649
        %v1714 = vmul.f32 %v1356, %v1650
        %v1715 = vmul.f32 %v1358, %v1651
        %v1716 = vmul.f32 %v1582, %v1652
        %v1717 = vmul.f32 %v1584, %v1653
        %v1718 = vmul.f32 %v1362, %v1654
        %v1719 = vmul.f32 %v1364, %v1655
        %v1720 = vmul.f32 %v1588, %v1656
        %v1721 = vmul.f32 %v1590, %v1657
        %v1722 = vmul.f32 %v1366, %v1658
        %v1723 = vmul.f32 %v1368, %v1659
        %v1724 = vmul.f32 %v1592, %v1660
        %v1725 = vmul.f32 %v1594, %v1661
        %v1726 = vmul.f32 %v1372, %v1662
        %v1727 = vmul.f32 %v1374, %v1663
        %v1728 = vmul.f32 %v1598, %v1664
        %v1729 = vmul.f32 %v1600, %v1665
        %v1730 = vmul.f32 %v1376, %v1666
        %v1731 = vmul.f32 %v1378, %v1667
        %v1732 = vmul.f32 %v1602, %v1668
        %v1733 = vmul.f32 %v1604, %v1669
        %v1734 = vmul.f32 %v1670, 0.044715
        %v1735 = vmul.f32 %v1671, 0.044715
        %v1736 = vmul.f32 %v1672, 0.044715
        %v1737 = vmul.f32 %v1673, 0.044715
        %v1738 = vmul.f32 %v1674, 0.044715
        %v1739 = vmul.f32 %v1675, 0.044715
        %v1740 = vmul.f32 %v1676, 0.044715
        %v1741 = vmul.f32 %v1677, 0.044715
        %v1742 = vmul.f32 %v1678, 0.044715
        %v1743 = vmul.f32 %v1679, 0.044715
        %v1744 = vmul.f32 %v1680, 0.044715
        %v1745 = vmul.f32 %v1681, 0.044715
        %v1746 = vmul.f32 %v1682, 0.044715
        %v1747 = vmul.f32 %v1683, 0.044715
        %v1748 = vmul.f32 %v1684, 0.044715
        %v1749 = vmul.f32 %v1685, 0.044715
        %v1750 = vmul.f32 %v1686, 0.044715
        %v1751 = vmul.f32 %v1687, 0.044715
        %v1752 = vmul.f32 %v1688, 0.044715
        %v1753 = vmul.f32 %v1689, 0.044715
        %v1754 = vmul.f32 %v1690, 0.044715
        %v1755 = vmul.f32 %v1691, 0.044715
        %v1756 = vmul.f32 %v1692, 0.044715
        %v1757 = vmul.f32 %v1693, 0.044715
        %v1758 = vmul.f32 %v1694, 0.044715
        %v1759 = vmul.f32 %v1695, 0.044715
        %v1760 = vmul.f32 %v1696, 0.044715
        %v1761 = vmul.f32 %v1697, 0.044715
        %v1762 = vmul.f32 %v1698, 0.044715
        %v1763 = vmul.f32 %v1699, 0.044715
        %v1764 = vmul.f32 %v1700, 0.044715
        %v1765 = vmul.f32 %v1701, 0.044715
        %v1766 = vmul.f32 %v1702, 0.044715
        %v1767 = vmul.f32 %v1703, 0.044715
        %v1768 = vmul.f32 %v1704, 0.044715
        %v1769 = vmul.f32 %v1705, 0.044715
        %v1770 = vmul.f32 %v1706, 0.044715
        %v1771 = vmul.f32 %v1707, 0.044715
        %v1772 = vmul.f32 %v1708, 0.044715
        %v1773 = vmul.f32 %v1709, 0.044715
        %v1774 = vmul.f32 %v1710, 0.044715
        %v1775 = vmul.f32 %v1711, 0.044715
        %v1776 = vmul.f32 %v1712, 0.044715
        %v1777 = vmul.f32 %v1713, 0.044715
        %v1778 = vmul.f32 %v1714, 0.044715
        %v1779 = vmul.f32 %v1715, 0.044715
        %v1780 = vmul.f32 %v1716, 0.044715
        %v1781 = vmul.f32 %v1717, 0.044715
        %v1782 = vmul.f32 %v1718, 0.044715
        %v1783 = vmul.f32 %v1719, 0.044715
        %v1784 = vmul.f32 %v1720, 0.044715
        %v1785 = vmul.f32 %v1721, 0.044715
        %v1786 = vmul.f32 %v1722, 0.044715
        %v1787 = vmul.f32 %v1723, 0.044715
        %v1788 = vmul.f32 %v1724, 0.044715
        %v1789 = vmul.f32 %v1725, 0.044715
        %v1790 = vmul.f32 %v1726, 0.044715
        %v1791 = vmul.f32 %v1727, 0.044715
        %v1792 = vmul.f32 %v1728, 0.044715
        %v1793 = vmul.f32 %v1729, 0.044715
        %v1794 = vmul.f32 %v1730, 0.044715
        %v1795 = vmul.f32 %v1731, 0.044715
        %v1796 = vmul.f32 %v1732, 0.044715
        %v1797 = vmul.f32 %v1733, 0.044715
        %v1798 = vadd.f32 %v1302, %v1734
        %v1799 = vadd.f32 %v1304, %v1735
        %v1800 = vadd.f32 %v1528, %v1736
        %v1801 = vadd.f32 %v1530, %v1737
        %v1802 = vadd.f32 %v1306, %v1738
        %v1803 = vadd.f32 %v1308, %v1739
        %v1804 = vadd.f32 %v1532, %v1740
        %v1805 = vadd.f32 %v1534, %v1741
        %v1806 = vadd.f32 %v1312, %v1742
        %v1807 = vadd.f32 %v1314, %v1743
        %v1808 = vadd.f32 %v1538, %v1744
        %v1809 = vadd.f32 %v1540, %v1745
        %v1810 = vadd.f32 %v1316, %v1746
        %v1811 = vadd.f32 %v1318, %v1747
        %v1812 = vadd.f32 %v1542, %v1748
        %v1813 = vadd.f32 %v1544, %v1749
        %v1814 = vadd.f32 %v1322, %v1750
        %v1815 = vadd.f32 %v1324, %v1751
        %v1816 = vadd.f32 %v1548, %v1752
        %v1817 = vadd.f32 %v1550, %v1753
        %v1818 = vadd.f32 %v1326, %v1754
        %v1819 = vadd.f32 %v1328, %v1755
        %v1820 = vadd.f32 %v1552, %v1756
        %v1821 = vadd.f32 %v1554, %v1757
        %v1822 = vadd.f32 %v1332, %v1758
        %v1823 = vadd.f32 %v1334, %v1759
        %v1824 = vadd.f32 %v1558, %v1760
        %v1825 = vadd.f32 %v1560, %v1761
        %v1826 = vadd.f32 %v1336, %v1762
        %v1827 = vadd.f32 %v1338, %v1763
        %v1828 = vadd.f32 %v1562, %v1764
        %v1829 = vadd.f32 %v1564, %v1765
        %v1830 = vadd.f32 %v1342, %v1766
        %v1831 = vadd.f32 %v1344, %v1767
        %v1832 = vadd.f32 %v1568, %v1768
        %v1833 = vadd.f32 %v1570, %v1769
        %v1834 = vadd.f32 %v1346, %v1770
        %v1835 = vadd.f32 %v1348, %v1771
        %v1836 = vadd.f32 %v1572, %v1772
        %v1837 = vadd.f32 %v1574, %v1773
        %v1838 = vadd.f32 %v1352, %v1774
        %v1839 = vadd.f32 %v1354, %v1775
        %v1840 = vadd.f32 %v1578, %v1776
        %v1841 = vadd.f32 %v1580, %v1777
        %v1842 = vadd.f32 %v1356, %v1778
        %v1843 = vadd.f32 %v1358, %v1779
        %v1844 = vadd.f32 %v1582, %v1780
        %v1845 = vadd.f32 %v1584, %v1781
        %v1846 = vadd.f32 %v1362, %v1782
        %v1847 = vadd.f32 %v1364, %v1783
        %v1848 = vadd.f32 %v1588, %v1784
        %v1849 = vadd.f32 %v1590, %v1785
        %v1850 = vadd.f32 %v1366, %v1786
        %v1851 = vadd.f32 %v1368, %v1787
        %v1852 = vadd.f32 %v1592, %v1788
        %v1853 = vadd.f32 %v1594, %v1789
        %v1854 = vadd.f32 %v1372, %v1790
        %v1855 = vadd.f32 %v1374, %v1791
        %v1856 = vadd.f32 %v1598, %v1792
        %v1857 = vadd.f32 %v1600, %v1793
        %v1858 = vadd.f32 %v1376, %v1794
        %v1859 = vadd.f32 %v1378, %v1795
        %v1860 = vadd.f32 %v1602, %v1796
        %v1861 = vadd.f32 %v1604, %v1797
        %v1862 = vmul.f32 %v1798, 0.7978846
        %v1863 = vmul.f32 %v1799, 0.7978846
        %v1864 = vmul.f32 %v1800, 0.7978846
        %v1865 = vmul.f32 %v1801, 0.7978846
        %v1866 = vmul.f32 %v1802, 0.7978846
        %v1867 = vmul.f32 %v1803, 0.7978846
        %v1868 = vmul.f32 %v1804, 0.7978846
        %v1869 = vmul.f32 %v1805, 0.7978846
        %v1870 = vmul.f32 %v1806, 0.7978846
        %v1871 = vmul.f32 %v1807, 0.7978846
        %v1872 = vmul.f32 %v1808, 0.7978846
        %v1873 = vmul.f32 %v1809, 0.7978846
        %v1874 = vmul.f32 %v1810, 0.7978846
        %v1875 = vmul.f32 %v1811, 0.7978846
        %v1876 = vmul.f32 %v1812, 0.7978846
        %v1877 = vmul.f32 %v1813, 0.7978846
        %v1878 = vmul.f32 %v1814, 0.7978846
        %v1879 = vmul.f32 %v1815, 0.7978846
        %v1880 = vmul.f32 %v1816, 0.7978846
        %v1881 = vmul.f32 %v1817, 0.7978846
        %v1882 = vmul.f32 %v1818, 0.7978846
        %v1883 = vmul.f32 %v1819, 0.7978846
        %v1884 = vmul.f32 %v1820, 0.7978846
        %v1885 = vmul.f32 %v1821, 0.7978846
        %v1886 = vmul.f32 %v1822, 0.7978846
        %v1887 = vmul.f32 %v1823, 0.7978846
        %v1888 = vmul.f32 %v1824, 0.7978846
        %v1889 = vmul.f32 %v1825, 0.7978846
        %v1890 = vmul.f32 %v1826, 0.7978846
        %v1891 = vmul.f32 %v1827, 0.7978846
        %v1892 = vmul.f32 %v1828, 0.7978846
        %v1893 = vmul.f32 %v1829, 0.7978846
        %v1894 = vmul.f32 %v1830, 0.7978846
        %v1895 = vmul.f32 %v1831, 0.7978846
        %v1896 = vmul.f32 %v1832, 0.7978846
        %v1897 = vmul.f32 %v1833, 0.7978846
        %v1898 = vmul.f32 %v1834, 0.7978846
        %v1899 = vmul.f32 %v1835, 0.7978846
        %v1900 = vmul.f32 %v1836, 0.7978846
        %v1901 = vmul.f32 %v1837, 0.7978846
        %v1902 = vmul.f32 %v1838, 0.7978846
        %v1903 = vmul.f32 %v1839, 0.7978846
        %v1904 = vmul.f32 %v1840, 0.7978846
        %v1905 = vmul.f32 %v1841, 0.7978846
        %v1906 = vmul.f32 %v1842, 0.7978846
        %v1907 = vmul.f32 %v1843, 0.7978846
        %v1908 = vmul.f32 %v1844, 0.7978846
        %v1909 = vmul.f32 %v1845, 0.7978846
        %v1910 = vmul.f32 %v1846, 0.7978846
        %v1911 = vmul.f32 %v1847, 0.7978846
        %v1912 = vmul.f32 %v1848, 0.7978846
        %v1913 = vmul.f32 %v1849, 0.7978846
        %v1914 = vmul.f32 %v1850, 0.7978846
        %v1915 = vmul.f32 %v1851, 0.7978846
        %v1916 = vmul.f32 %v1852, 0.7978846
        %v1917 = vmul.f32 %v1853, 0.7978846
        %v1918 = vmul.f32 %v1854, 0.7978846
        %v1919 = vmul.f32 %v1855, 0.7978846
        %v1920 = vmul.f32 %v1856, 0.7978846
        %v1921 = vmul.f32 %v1857, 0.7978846
        %v1922 = vmul.f32 %v1858, 0.7978846
        %v1923 = vmul.f32 %v1859, 0.7978846
        %v1924 = vmul.f32 %v1860, 0.7978846
        %v1925 = vmul.f32 %v1861, 0.7978846
        %v1926 = vtanh.pop %v1862
        %v1927 = vtanh.pop %v1863
        %v1928 = vtanh.pop %v1864
        %v1929 = vtanh.pop %v1865
        %v1930 = vtanh.pop %v1866
        %v1931 = vtanh.pop %v1867
        %v1932 = vtanh.pop %v1868
        %v1933 = vtanh.pop %v1869
        %v1934 = vtanh.pop %v1870
        %v1935 = vtanh.pop %v1871
        %v1936 = vtanh.pop %v1872
        %v1937 = vtanh.pop %v1873
        %v1938 = vtanh.pop %v1874
        %v1939 = vtanh.pop %v1875
        %v1940 = vtanh.pop %v1876
        %v1941 = vtanh.pop %v1877
        %v1942 = vtanh.pop %v1878
        %v1943 = vtanh.pop %v1879
        %v1944 = vtanh.pop %v1880
        %v1945 = vtanh.pop %v1881
        %v1946 = vtanh.pop %v1882
        %v1947 = vtanh.pop %v1883
        %v1948 = vtanh.pop %v1884
        %v1949 = vtanh.pop %v1885
        %v1950 = vtanh.pop %v1886
        %v1951 = vtanh.pop %v1887
        %v1952 = vtanh.pop %v1888
        %v1953 = vtanh.pop %v1889
        %v1954 = vtanh.pop %v1890
        %v1955 = vtanh.pop %v1891
        %v1956 = vtanh.pop %v1892
        %v1957 = vtanh.pop %v1893
        %v1958 = vtanh.pop %v1894
        %v1959 = vtanh.pop %v1895
        %v1960 = vtanh.pop %v1896
        %v1961 = vtanh.pop %v1897
        %v1962 = vtanh.pop %v1898
        %v1963 = vtanh.pop %v1899
        %v1964 = vtanh.pop %v1900
        %v1965 = vtanh.pop %v1901
        %v1966 = vtanh.pop %v1902
        %v1967 = vtanh.pop %v1903
        %v1968 = vtanh.pop %v1904
        %v1969 = vtanh.pop %v1905
        %v1970 = vtanh.pop %v1906
        %v1971 = vtanh.pop %v1907
        %v1972 = vtanh.pop %v1908
        %v1973 = vtanh.pop %v1909
        %v1974 = vtanh.pop %v1910
        %v1975 = vtanh.pop %v1911
        %v1976 = vtanh.pop %v1912
        %v1977 = vtanh.pop %v1913
        %v1978 = vtanh.pop %v1914
        %v1979 = vtanh.pop %v1915
        %v1980 = vtanh.pop %v1916
        %v1981 = vtanh.pop %v1917
        %v1982 = vtanh.pop %v1918
        %v1983 = vtanh.pop %v1919
        %v1984 = vtanh.pop %v1920
        %v1985 = vtanh.pop %v1921
        %v1986 = vtanh.pop %v1922
        %v1987 = vtanh.pop %v1923
        %v1988 = vtanh.pop %v1924
        %v1989 = vtanh.pop %v1925
        %v1990 = vadd.f32 %v1926, 1.0
        %v1991 = vadd.f32 %v1927, 1.0
        %v1992 = vadd.f32 %v1928, 1.0
        %v1993 = vadd.f32 %v1929, 1.0
        %v1994 = vadd.f32 %v1930, 1.0
        %v1995 = vadd.f32 %v1931, 1.0
        %v1996 = vadd.f32 %v1932, 1.0
        %v1997 = vadd.f32 %v1933, 1.0
        %v1998 = vadd.f32 %v1934, 1.0
        %v1999 = vadd.f32 %v1935, 1.0
        %v2000 = vadd.f32 %v1936, 1.0
        %v2001 = vadd.f32 %v1937, 1.0
        %v2002 = vadd.f32 %v1938, 1.0
        %v2003 = vadd.f32 %v1939, 1.0
        %v2004 = vadd.f32 %v1940, 1.0
        %v2005 = vadd.f32 %v1941, 1.0
        %v2006 = vadd.f32 %v1942, 1.0
        %v2007 = vadd.f32 %v1943, 1.0
        %v2008 = vadd.f32 %v1944, 1.0
        %v2009 = vadd.f32 %v1945, 1.0
        %v2010 = vadd.f32 %v1946, 1.0
        %v2011 = vadd.f32 %v1947, 1.0
        %v2012 = vadd.f32 %v1948, 1.0
        %v2013 = vadd.f32 %v1949, 1.0
        %v2014 = vadd.f32 %v1950, 1.0
        %v2015 = vadd.f32 %v1951, 1.0
        %v2016 = vadd.f32 %v1952, 1.0
        %v2017 = vadd.f32 %v1953, 1.0
        %v2018 = vadd.f32 %v1954, 1.0
        %v2019 = vadd.f32 %v1955, 1.0
        %v2020 = vadd.f32 %v1956, 1.0
        %v2021 = vadd.f32 %v1957, 1.0
        %v2022 = vadd.f32 %v1958, 1.0
        %v2023 = vadd.f32 %v1959, 1.0
        %v2024 = vadd.f32 %v1960, 1.0
        %v2025 = vadd.f32 %v1961, 1.0
        %v2026 = vadd.f32 %v1962, 1.0
        %v2027 = vadd.f32 %v1963, 1.0
        %v2028 = vadd.f32 %v1964, 1.0
        %v2029 = vadd.f32 %v1965, 1.0
        %v2030 = vadd.f32 %v1966, 1.0
        %v2031 = vadd.f32 %v1967, 1.0
        %v2032 = vadd.f32 %v1968, 1.0
        %v2033 = vadd.f32 %v1969, 1.0
        %v2034 = vadd.f32 %v1970, 1.0
        %v2035 = vadd.f32 %v1971, 1.0
        %v2036 = vadd.f32 %v1972, 1.0
        %v2037 = vadd.f32 %v1973, 1.0
        %v2038 = vadd.f32 %v1974, 1.0
        %v2039 = vadd.f32 %v1975, 1.0
        %v2040 = vadd.f32 %v1976, 1.0
        %v2041 = vadd.f32 %v1977, 1.0
        %v2042 = vadd.f32 %v1978, 1.0
        %v2043 = vadd.f32 %v1979, 1.0
        %v2044 = vadd.f32 %v1980, 1.0
        %v2045 = vadd.f32 %v1981, 1.0
        %v2046 = vadd.f32 %v1982, 1.0
        %v2047 = vadd.f32 %v1983, 1.0
        %v2048 = vadd.f32 %v1984, 1.0
        %v2049 = vadd.f32 %v1985, 1.0
        %v2050 = vadd.f32 %v1986, 1.0
        %v2051 = vadd.f32 %v1987, 1.0
        %v2052 = vadd.f32 %v1988, 1.0
        %v2053 = vadd.f32 %v1989, 1.0
        %v2054 = vmul.f32 %v1990, 0.5
        %v2055 = vmul.f32 %v1991, 0.5
        %v2056 = vmul.f32 %v1992, 0.5
        %v2057 = vmul.f32 %v1993, 0.5
        %v2058 = vmul.f32 %v1994, 0.5
        %v2059 = vmul.f32 %v1995, 0.5
        %v2060 = vmul.f32 %v1996, 0.5
        %v2061 = vmul.f32 %v1997, 0.5
        %v2062 = vmul.f32 %v1998, 0.5
        %v2063 = vmul.f32 %v1999, 0.5
        %v2064 = vmul.f32 %v2000, 0.5
        %v2065 = vmul.f32 %v2001, 0.5
        %v2066 = vmul.f32 %v2002, 0.5
        %v2067 = vmul.f32 %v2003, 0.5
        %v2068 = vmul.f32 %v2004, 0.5
        %v2069 = vmul.f32 %v2005, 0.5
        %v2070 = vmul.f32 %v2006, 0.5
        %v2071 = vmul.f32 %v2007, 0.5
        %v2072 = vmul.f32 %v2008, 0.5
        %v2073 = vmul.f32 %v2009, 0.5
        %v2074 = vmul.f32 %v2010, 0.5
        %v2075 = vmul.f32 %v2011, 0.5
        %v2076 = vmul.f32 %v2012, 0.5
        %v2077 = vmul.f32 %v2013, 0.5
        %v2078 = vmul.f32 %v2014, 0.5
        %v2079 = vmul.f32 %v2015, 0.5
        %v2080 = vmul.f32 %v2016, 0.5
        %v2081 = vmul.f32 %v2017, 0.5
        %v2082 = vmul.f32 %v2018, 0.5
        %v2083 = vmul.f32 %v2019, 0.5
        %v2084 = vmul.f32 %v2020, 0.5
        %v2085 = vmul.f32 %v2021, 0.5
        %v2086 = vmul.f32 %v2022, 0.5
        %v2087 = vmul.f32 %v2023, 0.5
        %v2088 = vmul.f32 %v2024, 0.5
        %v2089 = vmul.f32 %v2025, 0.5
        %v2090 = vmul.f32 %v2026, 0.5
        %v2091 = vmul.f32 %v2027, 0.5
        %v2092 = vmul.f32 %v2028, 0.5
        %v2093 = vmul.f32 %v2029, 0.5
        %v2094 = vmul.f32 %v2030, 0.5
        %v2095 = vmul.f32 %v2031, 0.5
        %v2096 = vmul.f32 %v2032, 0.5
        %v2097 = vmul.f32 %v2033, 0.5
        %v2098 = vmul.f32 %v2034, 0.5
        %v2099 = vmul.f32 %v2035, 0.5
        %v2100 = vmul.f32 %v2036, 0.5
        %v2101 = vmul.f32 %v2037, 0.5
        %v2102 = vmul.f32 %v2038, 0.5
        %v2103 = vmul.f32 %v2039, 0.5
        %v2104 = vmul.f32 %v2040, 0.5
        %v2105 = vmul.f32 %v2041, 0.5
        %v2106 = vmul.f32 %v2042, 0.5
        %v2107 = vmul.f32 %v2043, 0.5
        %v2108 = vmul.f32 %v2044, 0.5
        %v2109 = vmul.f32 %v2045, 0.5
        %v2110 = vmul.f32 %v2046, 0.5
        %v2111 = vmul.f32 %v2047, 0.5
        %v2112 = vmul.f32 %v2048, 0.5
        %v2113 = vmul.f32 %v2049, 0.5
        %v2114 = vmul.f32 %v2050, 0.5
        %v2115 = vmul.f32 %v2051, 0.5
        %v2116 = vmul.f32 %v2052, 0.5
        %v2117 = vmul.f32 %v2053, 0.5
        %v2118 = vmul.f32 %v1302, %v2054
        %v2119 = vmul.f32 %v1304, %v2055
        %v2120 = vmul.f32 %v1528, %v2056
        %v2121 = vmul.f32 %v1530, %v2057
        %v2122 = vmul.f32 %v1306, %v2058
        %v2123 = vmul.f32 %v1308, %v2059
        %v2124 = vmul.f32 %v1532, %v2060
        %v2125 = vmul.f32 %v1534, %v2061
        %v2126 = vmul.f32 %v1312, %v2062
        %v2127 = vmul.f32 %v1314, %v2063
        %v2128 = vmul.f32 %v1538, %v2064
        %v2129 = vmul.f32 %v1540, %v2065
        %v2130 = vmul.f32 %v1316, %v2066
        %v2131 = vmul.f32 %v1318, %v2067
        %v2132 = vmul.f32 %v1542, %v2068
        %v2133 = vmul.f32 %v1544, %v2069
        %v2134 = vmul.f32 %v1322, %v2070
        %v2135 = vmul.f32 %v1324, %v2071
        %v2136 = vmul.f32 %v1548, %v2072
        %v2137 = vmul.f32 %v1550, %v2073
        %v2138 = vmul.f32 %v1326, %v2074
        %v2139 = vmul.f32 %v1328, %v2075
        %v2140 = vmul.f32 %v1552, %v2076
        %v2141 = vmul.f32 %v1554, %v2077
        %v2142 = vmul.f32 %v1332, %v2078
        %v2143 = vmul.f32 %v1334, %v2079
        %v2144 = vmul.f32 %v1558, %v2080
        %v2145 = vmul.f32 %v1560, %v2081
        %v2146 = vmul.f32 %v1336, %v2082
        %v2147 = vmul.f32 %v1338, %v2083
        %v2148 = vmul.f32 %v1562, %v2084
        %v2149 = vmul.f32 %v1564, %v2085
        %v2150 = vmul.f32 %v1342, %v2086
        %v2151 = vmul.f32 %v1344, %v2087
        %v2152 = vmul.f32 %v1568, %v2088
        %v2153 = vmul.f32 %v1570, %v2089
        %v2154 = vmul.f32 %v1346, %v2090
        %v2155 = vmul.f32 %v1348, %v2091
        %v2156 = vmul.f32 %v1572, %v2092
        %v2157 = vmul.f32 %v1574, %v2093
        %v2158 = vmul.f32 %v1352, %v2094
        %v2159 = vmul.f32 %v1354, %v2095
        %v2160 = vmul.f32 %v1578, %v2096
        %v2161 = vmul.f32 %v1580, %v2097
        %v2162 = vmul.f32 %v1356, %v2098
        %v2163 = vmul.f32 %v1358, %v2099
        %v2164 = vmul.f32 %v1582, %v2100
        %v2165 = vmul.f32 %v1584, %v2101
        %v2166 = vmul.f32 %v1362, %v2102
        %v2167 = vmul.f32 %v1364, %v2103
        %v2168 = vmul.f32 %v1588, %v2104
        %v2169 = vmul.f32 %v1590, %v2105
        %v2170 = vmul.f32 %v1366, %v2106
        %v2171 = vmul.f32 %v1368, %v2107
        %v2172 = vmul.f32 %v1592, %v2108
        %v2173 = vmul.f32 %v1594, %v2109
        %v2174 = vmul.f32 %v1372, %v2110
        %v2175 = vmul.f32 %v1374, %v2111
        %v2176 = vmul.f32 %v1598, %v2112
        %v2177 = vmul.f32 %v1600, %v2113
        %v2178 = vmul.f32 %v1376, %v2114
        %v2179 = vmul.f32 %v1378, %v2115
        %v2180 = vmul.f32 %v1602, %v2116
        %v2181 = vmul.f32 %v1604, %v2117
        %v2182 = vld [vmem:[%s3] sm:$0xf]
        %v2183 = vpack.c.bf16 %v2122, %v2118
        %v2184 = vpack.c.bf16 %v2123, %v2119
        %v2185 = vpack.c.bf16 %v2124, %v2120
        %v2186 = vpack.c.bf16 %v2125, %v2121
        %v2187 = vpack.c.bf16 %v2130, %v2126
        %v2188 = vpack.c.bf16 %v2131, %v2127
        %v2189 = vpack.c.bf16 %v2132, %v2128
        %v2190 = vpack.c.bf16 %v2133, %v2129
        %v2191 = vpack.c.bf16 %v2138, %v2134
        %v2192 = vpack.c.bf16 %v2139, %v2135
        %v2193 = vpack.c.bf16 %v2140, %v2136
        %v2194 = vpack.c.bf16 %v2141, %v2137
        %v2195 = vpack.c.bf16 %v2146, %v2142
        %v2196 = vpack.c.bf16 %v2147, %v2143
        %v2197 = vpack.c.bf16 %v2148, %v2144
        %v2198 = vpack.c.bf16 %v2149, %v2145
        %v2199 = vpack.c.bf16 %v2154, %v2150
        %v2200 = vpack.c.bf16 %v2155, %v2151
        %v2201 = vpack.c.bf16 %v2156, %v2152
        %v2202 = vpack.c.bf16 %v2157, %v2153
        %v2203 = vpack.c.bf16 %v2162, %v2158
        %v2204 = vpack.c.bf16 %v2163, %v2159
        %v2205 = vpack.c.bf16 %v2164, %v2160
        %v2206 = vpack.c.bf16 %v2165, %v2161
        %v2207 = vpack.c.bf16 %v2170, %v2166
        %v2208 = vpack.c.bf16 %v2171, %v2167
        %v2209 = vpack.c.bf16 %v2172, %v2168
        %v2210 = vpack.c.bf16 %v2173, %v2169
        %v2211 = vpack.c.bf16 %v2178, %v2174
        %v2212 = vpack.c.bf16 %v2179, %v2175
        %v2213 = vpack.c.bf16 %v2180, %v2176
        %v2214 = vpack.c.bf16 %v2181, %v2177
        %s2215 = sld [smem:[#allocation2]]
        %v2216 = vstv %s2215
        %v2219 = vunpack.c.l.s4 1966171168
        %v2220 = vunpack.c.0.s8 %v2219
        %v2221 = vlaneseq
        %v2222 = vshrl.u32 %v2221, 7
        %v2223 = vsub.s32 %v2220, %v2222
        %v2224 = vrot.slane %v2182, %v2223
        %v2225 = vcombine.high %v2224, %v2224
        %v2227 = vunpack.c.l.s4 1966171168
        %v2228 = vunpack.c.0.s8 %v2227
        %v2229 = vlaneseq
        %v2230 = vshrl.u32 %v2229, 7
        %v2231 = vsub.s32 %v2228, %v2230
        %v2232 = vrot.slane %v2224, %v2231
        %v2234 = vunpack.c.l.s4 1966171168
        %v2235 = vunpack.c.0.s8 %v2234
        %v2236 = vlaneseq
        %v2237 = vshrl.u32 %v2236, 7
        %v2238 = vsub.s32 %v2235, %v2237
        %v2239 = vrot.slane %v2225, %v2238
        %v2240 = vcombine.high %v2232, %v2232
        %v2241 = vcombine.high %v2239, %v2239
        %2246 = vmatprep.subr.bf16.mxu0 %v2212
        %2247 = vmatpush1.bf16.xpose.msra.mxu0 %v2211
        %2248 = vmatprep.subr.bf16.mxu0 %v2208
        %2249 = vmatpush1.bf16.xpose.msra.mxu0 %v2207
        %2250 = vmatprep.subr.bf16.mxu0 %v2204
        %2251 = vmatpush1.bf16.xpose.msra.mxu0 %v2203
        %2252 = vmatprep.subr.bf16.mxu0 %v2200
        %2253 = vmatpush1.bf16.xpose.msra.mxu0 %v2199
        %2254 = vmatprep.subr.bf16.mxu0 %v2196
        %2255 = vmatpush1.bf16.xpose.msra.mxu0 %v2195
        %2256 = vmatprep.subr.bf16.mxu0 %v2192
        %2257 = vmatpush1.bf16.xpose.msra.mxu0 %v2191
        %2258 = vmatprep.subr.bf16.mxu0 %v2188
        %2259 = vmatpush1.bf16.xpose.msra.mxu0 %v2187
        %2260 = vmatprep.subr.bf16.mxu0 %v2184
        %2261 = vmatpush1.bf16.xpose.msra.mxu0 %v2183
        %2262 = vmatprep.subr.bf16.mxu0 0
        %2263 = vmatpush2.bf16.xpose.msra.mxu0 0
        %2264 = vmatprep.subr.bf16.mxu0 0
        %2265 = vmatpush2.bf16.xpose.msra.mxu0 0
        %2266 = vmatprep.subr.bf16.mxu0 0
        %2267 = vmatpush2.bf16.xpose.msra.mxu0 0
        %2268 = vmatprep.subr.bf16.mxu0 0
        %2269 = vmatpush2.bf16.xpose.msra.mxu0 0
        %2270 = vmatprep.subr.bf16.mxu0 0
        %2271 = vmatpush2.bf16.xpose.msra.mxu0 0
        %2272 = vmatprep.subr.bf16.mxu0 0
        %2273 = vmatpush2.bf16.xpose.msra.mxu0 0
        %2274 = vmatprep.subr.bf16.mxu0 0
        %2275 = vmatpush2.bf16.xpose.msra.mxu0 0
        %2276 = vmatprep.subr.bf16.mxu0 0
        %2277 = vmatpush2.bf16.xpose.msra.mxu0 0
        %2278 = vmatprep.mubr.bf16.mxu0 %v2239
        %2279 = vmatmul.mubr.bf16.gmra.mxu0 %v2232
        %v2280 = vpop.f32.mrf.mxu0
        %v2281 = vadd.f32 %v2216, %v2280
        %v2282 = vpop.f32.mrf.mxu0
        %v2283 = vpop.f32.mrf.mxu0
        %v2284 = vpop.f32.mrf.mxu0
        %2285 = vdwg.mxu0
        %2286 = vmatprep.subr.bf16.mxu0 %v2214
        %2287 = vmatpush1.bf16.xpose.msra.mxu0 %v2213
        %2288 = vmatprep.subr.bf16.mxu0 %v2210
        %2289 = vmatpush1.bf16.xpose.msra.mxu0 %v2209
        %2290 = vmatprep.subr.bf16.mxu0 %v2206
        %2291 = vmatpush1.bf16.xpose.msra.mxu0 %v2205
        %2292 = vmatprep.subr.bf16.mxu0 %v2202
        %2293 = vmatpush1.bf16.xpose.msra.mxu0 %v2201
        %2294 = vmatprep.subr.bf16.mxu0 %v2198
        %2295 = vmatpush1.bf16.xpose.msra.mxu0 %v2197
        %2296 = vmatprep.subr.bf16.mxu0 %v2194
        %2297 = vmatpush1.bf16.xpose.msra.mxu0 %v2193
        %2298 = vmatprep.subr.bf16.mxu0 %v2190
        %2299 = vmatpush1.bf16.xpose.msra.mxu0 %v2189
        %2300 = vmatprep.subr.bf16.mxu0 %v2186
        %2301 = vmatpush1.bf16.xpose.msra.mxu0 %v2185
        %2302 = vmatprep.subr.bf16.mxu0 0
        %2303 = vmatpush2.bf16.xpose.msra.mxu0 0
        %2304 = vmatprep.subr.bf16.mxu0 0
        %2305 = vmatpush2.bf16.xpose.msra.mxu0 0
        %2306 = vmatprep.subr.bf16.mxu0 0
        %2307 = vmatpush2.bf16.xpose.msra.mxu0 0
        %2308 = vmatprep.subr.bf16.mxu0 0
        %2309 = vmatpush2.bf16.xpose.msra.mxu0 0
        %2310 = vmatprep.subr.bf16.mxu0 0
        %2311 = vmatpush2.bf16.xpose.msra.mxu0 0
        %2312 = vmatprep.subr.bf16.mxu0 0
        %2313 = vmatpush2.bf16.xpose.msra.mxu0 0
        %2314 = vmatprep.subr.bf16.mxu0 0
        %2315 = vmatpush2.bf16.xpose.msra.mxu0 0
        %2316 = vmatprep.subr.bf16.mxu0 0
        %2317 = vmatpush2.bf16.xpose.msra.mxu0 0
        %2318 = vmatprep.mubr.bf16.mxu0 %v2241
        %2319 = vmatmul.mubr.bf16.gmra.mxu0 %v2240
        %v2320 = vpop.f32.mrf.mxu0
        %v2321 = vadd.f32 %v2281, %v2320
        %v2322 = vpop.f32.mrf.mxu0
        %v2323 = vpop.f32.mrf.mxu0
        %v2324 = vpop.f32.mrf.mxu0
        %2325 = vdwg.mxu0
        %2326 = vst [vmem:[%s266] sm:$0x1] %v2321
        %p2327 = scmp.lt.s32.totalorder %s18, 2
        %s2328 = scalar_select %p2327, %s18, 2
        %s2329 = scalar_lea.vmem %s5, %s2328
        // Predicated region
        $region45: #{reranker_forward.1} parent=39 // pred_check
          %p2330 = pneg %p146
        $region46: #{reranker_forward.1} parent=39 // pred_check_branch
          %2332 = sbr.rel (%p2330) target = $region48
        $region47: #{reranker_forward.1} parent=39 // pred_region
          _
        $region48: #{reranker_forward.1} parent=39 // pred_fallthru
          _
      $region40: #{reranker_forward.1} parent=5 // pred_fallthru
        _
      %p2333 = scmp.le.s32.totalorder 2, %s13
      // Predicated region
      $region49: #{reranker_forward.1} parent=5 // pred_check
        %p2334 = pneg %p2333
      $region50: #{reranker_forward.1} parent=5 // pred_check_branch
        %2336 = sbr.rel (%p2334) target = $region52
      $region51: #{reranker_forward.1} parent=5 // pred_region
        %s2337 = ssub.s32 %s13, 2
        // Predicated region
        $region53: #{reranker_forward.1} parent=51 // pred_check
          %p2338 = pneg %p152
        $region54: #{reranker_forward.1} parent=51 // pred_check_branch
          %2340 = sbr.rel (%p2338) target = $region56
        $region55: #{reranker_forward.1} parent=51 // pred_region
          %p2341 = scmp.lt.s32.totalorder %s19, 2
          %s2342 = scalar_select %p2341, %s19, 2
          %s2343 = scalar_lea.vmem %s5, %s2342
        $region56: #{reranker_forward.1} parent=51 // pred_fallthru
          _
      $region52: #{reranker_forward.1} parent=5 // pred_fallthru
        _
    $region6: #{reranker_forward.1} parent=1 // loop_footer
      %s17 = sadd.s32 1, %s13
    $region7: #{reranker_forward.1} parent=1 // loop_footer_branch
      %12 = sbr.rel target = $region3
    $region8: #{reranker_forward.1} parent=1 // loop_exit
      _
    %2344 = vsyncpa [#allocation4], 1
    %s2345 = scalar_lea.sflag [#allocation4], 1
    %2346 = vsyncpa %s2345, 1

</llo_original>
